<compile_context>
chip_gen: v7x
topology: tpu7x:2x2x1
jax: 0.10.0
libtpu: 0.0.40
codegen_flags: <defaults>
</compile_context>

<pallas_src>
import functools

import jax
import jax.numpy as jnp
from jax.experimental import pallas as pl
from jax.experimental.pallas import tpu as pltpu


GS = 8  # pixel-group size = one sublane tile


# ----------------------------------------------------------------------------
# Fused kernel: conv body + multiplicative layer + flatten-free head MLP.
# ----------------------------------------------------------------------------
def _critic_kernel(B, P, CA, NF, mxu_dtype,
                   x_ref, w1_ref, b1_ref, wvw_ref, bvw_ref,
                   w2g_hbm, b2_ref, w3_ref, b3_ref, mask_ref,
                   out_ref, w2g_vmem, dma_sem):
    G = P // GS
    GN = GS * NF

    # Kick off the head-weight DMA (largest input) so it overlaps the
    # conv / multiplicative front-end compute.
    w2g_copy = pltpu.make_async_copy(w2g_hbm, w2g_vmem, dma_sem)
    w2g_copy.start()

    # ---- front: 1x1 conv (+ReLU) and multiplicative layer -------------------
    x = x_ref[...]                                                # (B*P, Cin)
    h = jnp.maximum(
        jnp.dot(x, w1_ref[...], preferred_element_type=jnp.float32)
        + b1_ref[...], 0.0)                                       # (B*P, K)

    # Fused v/w projection: one matmul, outer-product broadcast already folded
    # into the weights (repeat/tile), so the multiplicative layer is a single
    # lane-dense elementwise multiply.
    vw = jnp.dot(h, wvw_ref[...], preferred_element_type=jnp.float32) \
        + bvw_ref[...]                                            # (B*P, 2*CA)
    v = vw[:, :CA]
    w = vw[:, CA:]
    feat = jnp.maximum(v * w, 0.0)                                # (B*P, CA)

    # ---- head: flatten-free, K-blocked over 8-pixel groups ------------------
    # hidden[b, f] = sum_{p,c} feat[b*P+p, c] * w2[p*CA+c, f]
    # is computed as, per batch, sum over groups g of
    #   (8-row feat tile) @ w2g[g]            -> (8, 8*NF) accumulator
    # then a 0/1 mask selects each pixel's own NF-wide block, a sublane sum
    # and 8 exact lane-segment adds finish the contraction.
    w2g_copy.wait()
    mask = mask_ref[...]                                          # (GS, GN)

    z_rows = []
    for b in range(B):
        acc = jnp.zeros((GS, GN), jnp.float32)
        for g in range(G):
            r0 = b * P + g * GS
            chunk = feat[r0:r0 + GS, :].astype(mxu_dtype)         # (GS, CA)
            acc = acc + jnp.dot(chunk, w2g_vmem[g],
                                preferred_element_type=jnp.float32)
        z_rows.append(jnp.sum(acc * mask, axis=0, keepdims=True))  # (1, GN)
    z = jnp.concatenate(z_rows, axis=0)                           # (B, GN)

    # Sum the GS lane-segments (exact f32 adds; avoids a degenerate matmul).
    hidden_pre = z[:, 0:NF]
    for s in range(1, GS):
        hidden_pre = hidden_pre + z[:, s * NF:(s + 1) * NF]
    hidden = jnp.maximum(hidden_pre + b2_ref[...], 0.0)           # (B, NF)

    # Critic head: N=1 MXU matmul replaced by VPU multiply + lane reduce.
    out_ref[...] = (jnp.sum(hidden * w3_ref[...], axis=-1, keepdims=True)
                    + b3_ref[...])                                # (B, 1)


# ----------------------------------------------------------------------------
# One-time weight folding (hoisted out of the per-call path).
# ----------------------------------------------------------------------------
def fold_params(params, *, P, mxu_dtype=jnp.float32):
    """Re-pack PyTorch-style weights into the kernel-ready layout. Done once."""
    K = params["wv"].shape[1]
    A = params["ww"].shape[1]
    CA = K * A
    NF = params["w2"].shape[1]
    assert P % GS == 0, "P must be a multiple of 8"
    G = P // GS
    GN = GS * NF
    assert params["w2"].shape[0] == P * CA

    # Multiplicative layer: fold the outer-product broadcast into the weights
    # (repeat each v-channel A times / tile the w-channels K times) and fuse
    # the v and w projections into a single (K, 2*CA) matmul.
    wvw = jnp.concatenate([jnp.repeat(params["wv"], A, axis=1),
                           jnp.tile(params["ww"], (1, K))], axis=1)
    bvw = jnp.concatenate([jnp.repeat(params["bv"], A, axis=1),
                           jnp.tile(params["bw"], (1, K))], axis=1)

    # Head weight re-packed for the flatten-free blocked head matmul:
    #   w2g[g, c, s*NF + f] = w2[(g*GS + s)*CA + c, f]
    w2g = (params["w2"].reshape(G, GS, CA, NF)
           .transpose(0, 2, 1, 3).reshape(G, CA, GN)).astype(mxu_dtype)

    # mask[s, s'*NF + f] = 1 iff s' == s  (each pixel keeps its own w2 block).
    mask = jnp.repeat(jnp.eye(GS, dtype=jnp.float32), NF, axis=1)  # (GS, GN)

    return {
        "w1": params["w1"], "b1": params["b1"],
        "wvw": wvw, "bvw": bvw,
        "w2g": w2g, "b2": params["b2"],
        "w3_row": params["w3"].T,              # (1, NF) for the VPU head
        "b3": params["b3"],
        "mask": mask,
    }


# ----------------------------------------------------------------------------
# Forward wrapper
# ----------------------------------------------------------------------------
@jax.jit
def multiplicative_basic_critic(state_nchw, folded):
    """state_nchw: (B, Cin, H, W) float32  ->  V: (B, 1) float32."""
    B, Cin, H, W = state_nchw.shape
    P = H * W
    K = folded["w1"].shape[1]
    CA = folded["wvw"].shape[1] // 2
    NF = folded["b2"].shape[1]
    G = P // GS
    GN = GS * NF
    mxu_dtype = folded["w2g"].dtype
    assert folded["w2g"].shape == (G, CA, GN)

    # NCHW -> (B*P, Cin): batch-major rows (row = b*P + p), channels on lanes.
    x = jnp.transpose(state_nchw, (0, 2, 3, 1)).reshape(B * P, Cin)

    kernel = functools.partial(_critic_kernel, B, P, CA, NF, mxu_dtype)

    flops = (2 * B * P * Cin * K            # 1x1 conv
             + 2 * B * P * K * 2 * CA       # fused v/w projection
             + 2 * B * P * CA               # multiply + relu
             + 2 * B * P * CA * GN          # blocked head matmuls (8x widened)
             + 3 * B * GS * GN              # mask / reduce / segment adds
             + 2 * B * NF)                  # critic head
    bytes_accessed = (4 * (B * P * Cin + Cin * K + K + K * 2 * CA + 2 * CA
                           + NF + NF + 1 + GS * GN + B)
                      + folded["w2g"].size * folded["w2g"].dtype.itemsize)

    return pl.pallas_call(
        kernel,
        out_shape=jax.ShapeDtypeStruct((B, 1), jnp.float32),
        in_specs=([pl.BlockSpec(memory_space=pltpu.MemorySpace.VMEM)] * 5
                  + [pl.BlockSpec(memory_space=pl.ANY)]   # w2g stays in HBM
                  + [pl.BlockSpec(memory_space=pltpu.MemorySpace.VMEM)] * 4),
        out_specs=pl.BlockSpec(memory_space=pltpu.MemorySpace.VMEM),
        scratch_shapes=[pltpu.VMEM((G, CA, GN), mxu_dtype),
                        pltpu.SemaphoreType.DMA],
        cost_estimate=pl.CostEstimate(flops=flops, transcendentals=0,
                                      bytes_accessed=bytes_accessed),
    )(x, folded["w1"], folded["b1"], folded["wvw"], folded["bvw"],
      folded["w2g"], folded["b2"], folded["w3_row"], folded["b3"],
      folded["mask"])


# ----------------------------------------------------------------------------
# Deterministic parameter init (PyTorch-style uniform(-1/sqrt(fan_in), ...))
# ----------------------------------------------------------------------------
def init_params(key, *, cin, k_out, add_features, P, n_features):
    ks = jax.random.split(key, 10)

    def u(k, fan_in, shape):
        bound = 1.0 / float(fan_in) ** 0.5
        return jax.random.uniform(k, shape, jnp.float32, -bound, bound)

    n_flat = P * k_out * add_features
    return {
        "w1": u(ks[0], cin, (cin, k_out)),
        "b1": u(ks[1], cin, (1, k_out)),
        "wv": u(ks[2], k_out, (k_out, k_out)),
        "bv": u(ks[3], k_out, (1, k_out)),
        "ww": u(ks[4], k_out, (k_out, add_features)),
        "bw": u(ks[5], k_out, (1, add_features)),
        "w2": u(ks[6], n_flat, (n_flat, n_features)),
        "b2": u(ks[7], n_flat, (1, n_features)),
        "w3": u(ks[8], n_features, (n_features, 1)),
        "b3": u(ks[9], n_features, (1, 1)),
    }


# ----------------------------------------------------------------------------
# Pure-JAX reference (same math) for correctness check
# ----------------------------------------------------------------------------
def ref_forward(state_nchw, p):
    B, Cin, H, W = state_nchw.shape
    P = H * W
    x = jnp.transpose(state_nchw, (0, 2, 3, 1)).reshape(B, P, Cin)
    h = jax.nn.relu(x @ p["w1"] + p["b1"])
    v = h @ p["wv"] + p["bv"]
    w = h @ p["ww"] + p["bw"]
    out = jax.nn.relu(v[..., :, None] * w[..., None, :])    # (B, P, K, A)
    flat = out.reshape(B, -1)                                # pixel-major flatten
    hidden = jax.nn.relu(flat @ p["w2"] + p["b2"])
    return hidden @ p["w3"] + p["b3"]


if __name__ == "__main__":
    B, Cin, H, W = 2, 4, 8, 8          # linear_size = 8
    k_out, add_features, n_features = 8, 4, 32
    P = H * W

    key = jax.random.PRNGKey(0)
    k_state, k_params = jax.random.split(key)
    state = jax.random.normal(k_state, (B, Cin, H, W), jnp.float32)
    params = init_params(k_params, cin=Cin, k_out=k_out,
                         add_features=add_features, P=P,
                         n_features=n_features)

    V_ref = ref_forward(state, params)

    # f32 MXU path (strict check).
    folded_f32 = fold_params(params, P=P, mxu_dtype=jnp.float32)
    V = jax.block_until_ready(multiplicative_basic_critic(state, folded_f32))
    assert V.shape == (B, 1)
    assert jnp.allclose(V, V_ref, rtol=1e-4, atol=1e-4), (V, V_ref)

    # bf16 head-weight MXU path (v6e/v7x recommendation) — loosened tolerance.
    folded_bf16 = fold_params(params, P=P, mxu_dtype=jnp.bfloat16)
    V_bf16 = jax.block_until_ready(
        multiplicative_basic_critic(state, folded_bf16))
    assert jnp.allclose(V_bf16, V_ref, rtol=2e-2, atol=2e-2), (V_bf16, V_ref)

    print("KERNEL_OK")
</pallas_src>

<mosaic_0001>
module attributes {stable_mosaic.version = 11 : i64} {
  func.func @_critic_kernel(%arg0: memref<128x4xf32, #tpu.memory_space<vmem>>, %arg1: memref<4x8xf32, #tpu.memory_space<vmem>>, %arg2: memref<1x8xf32, #tpu.memory_space<vmem>>, %arg3: memref<8x64xf32, #tpu.memory_space<vmem>>, %arg4: memref<1x64xf32, #tpu.memory_space<vmem>>, %arg5: memref<8x32x256xf32, #tpu.memory_space<any>>, %arg6: memref<1x32xf32, #tpu.memory_space<vmem>>, %arg7: memref<1x32xf32, #tpu.memory_space<vmem>>, %arg8: memref<1x1xf32, #tpu.memory_space<vmem>>, %arg9: memref<8x256xf32, #tpu.memory_space<vmem>>, %arg10: memref<2x1xf32, #tpu.memory_space<vmem>>, %arg11: memref<8x32x256xf32, #tpu.memory_space<vmem>>, %arg12: memref<!tpu.dma_semaphore, #tpu.memory_space<semaphore_mem>>) attributes {dimension_semantics = [], scalar_prefetch = 0 : i64, scratch_operands = 2 : i64, tpu.core_type = #tpu.core_type<tc>} {
    tpu.enqueue_dma source(%arg5 : memref<8x32x256xf32, #tpu.memory_space<any>>) target(%arg11 : memref<8x32x256xf32, #tpu.memory_space<vmem>>) target_semaphore(%arg12 : memref<!tpu.dma_semaphore, #tpu.memory_space<semaphore_mem>>)
    %c0 = arith.constant 0 : index
    %c0_0 = arith.constant 0 : index
    %0 = vector.load %arg0[%c0, %c0_0] : memref<128x4xf32, #tpu.memory_space<vmem>>, vector<128x4xf32>
    %c0_1 = arith.constant 0 : index
    %c0_2 = arith.constant 0 : index
    %1 = vector.load %arg1[%c0_1, %c0_2] : memref<4x8xf32, #tpu.memory_space<vmem>>, vector<4x8xf32>
    %cst = arith.constant dense<0.000000e+00> : vector<128x8xf32>
    %2 = tpu.matmul %0, %1, %cst {dimension_numbers = #tpu.dot_dimension_numbers<[1], [0], [0], [1], [0, 0, 1, 1], [], []>} : vector<128x4xf32>, vector<4x8xf32>, vector<128x8xf32> -> vector<128x8xf32>
    %c0_3 = arith.constant 0 : index
    %c0_4 = arith.constant 0 : index
    %3 = vector.load %arg2[%c0_3, %c0_4] : memref<1x8xf32, #tpu.memory_space<vmem>>, vector<1x8xf32>
    %4 = vector.broadcast %3 : vector<1x8xf32> to vector<128x8xf32>
    %5 = arith.addf %2, %4 : vector<128x8xf32>
    %cst_5 = arith.constant 0.000000e+00 : f32
    %6 = vector.broadcast %cst_5 : f32 to vector<128x8xf32>
    %7 = arith.maximumf %5, %6 : vector<128x8xf32>
    %c0_6 = arith.constant 0 : index
    %c0_7 = arith.constant 0 : index
    %8 = vector.load %arg3[%c0_6, %c0_7] : memref<8x64xf32, #tpu.memory_space<vmem>>, vector<8x64xf32>
    %cst_8 = arith.constant dense<0.000000e+00> : vector<128x64xf32>
    %9 = tpu.matmul %7, %8, %cst_8 {dimension_numbers = #tpu.dot_dimension_numbers<[1], [0], [0], [1], [0, 0, 1, 1], [], []>} : vector<128x8xf32>, vector<8x64xf32>, vector<128x64xf32> -> vector<128x64xf32>
    %c0_9 = arith.constant 0 : index
    %c0_10 = arith.constant 0 : index
    %10 = vector.load %arg4[%c0_9, %c0_10] : memref<1x64xf32, #tpu.memory_space<vmem>>, vector<1x64xf32>
    %11 = vector.broadcast %10 : vector<1x64xf32> to vector<128x64xf32>
    %12 = arith.addf %9, %11 : vector<128x64xf32>
    %13 = vector.extract_strided_slice %12 {offsets = [0, 0], sizes = [128, 32], strides = [1, 1]} : vector<128x64xf32> to vector<128x32xf32>
    %14 = vector.extract_strided_slice %12 {offsets = [0, 32], sizes = [128, 32], strides = [1, 1]} : vector<128x64xf32> to vector<128x32xf32>
    %15 = arith.mulf %13, %14 : vector<128x32xf32>
    %cst_11 = arith.constant 0.000000e+00 : f32
    %16 = vector.broadcast %cst_11 : f32 to vector<128x32xf32>
    %17 = arith.maximumf %15, %16 : vector<128x32xf32>
    tpu.wait_dma2 semaphore(%arg12 : memref<!tpu.dma_semaphore, #tpu.memory_space<semaphore_mem>>) src(%arg5 : memref<8x32x256xf32, #tpu.memory_space<any>>) dst(%arg11 : memref<8x32x256xf32, #tpu.memory_space<vmem>>)
    %c0_12 = arith.constant 0 : index
    %c0_13 = arith.constant 0 : index
    %18 = vector.load %arg9[%c0_12, %c0_13] : memref<8x256xf32, #tpu.memory_space<vmem>>, vector<8x256xf32>
    %cst_14 = arith.constant 0.000000e+00 : f32
    %19 = vector.broadcast %cst_14 : f32 to vector<8x256xf32>
    %20 = vector.extract_strided_slice %17 {offsets = [0, 0], sizes = [8, 32], strides = [1, 1]} : vector<128x32xf32> to vector<8x32xf32>
    %c0_15 = arith.constant 0 : index
    %c0_16 = arith.constant 0 : index
    %c0_17 = arith.constant 0 : index
    %21 = vector.load %arg11[%c0_15, %c0_16, %c0_17] : memref<8x32x256xf32, #tpu.memory_space<vmem>>, vector<1x32x256xf32>
    %22 = vector.shape_cast %21 : vector<1x32x256xf32> to vector<32x256xf32>
    %cst_18 = arith.constant dense<0.000000e+00> : vector<8x256xf32>
    %23 = tpu.matmul %20, %22, %cst_18 {dimension_numbers = #tpu.dot_dimension_numbers<[1], [0], [0], [1], [0, 0, 1, 1], [], []>} : vector<8x32xf32>, vector<32x256xf32>, vector<8x256xf32> -> vector<8x256xf32>
    %24 = arith.addf %19, %23 : vector<8x256xf32>
    %25 = vector.extract_strided_slice %17 {offsets = [8, 0], sizes = [8, 32], strides = [1, 1]} : vector<128x32xf32> to vector<8x32xf32>
    %c1 = arith.constant 1 : index
    %c0_19 = arith.constant 0 : index
    %c0_20 = arith.constant 0 : index
    %26 = vector.load %arg11[%c1, %c0_19, %c0_20] : memref<8x32x256xf32, #tpu.memory_space<vmem>>, vector<1x32x256xf32>
    %27 = vector.shape_cast %26 : vector<1x32x256xf32> to vector<32x256xf32>
    %cst_21 = arith.constant dense<0.000000e+00> : vector<8x256xf32>
    %28 = tpu.matmul %25, %27, %cst_21 {dimension_numbers = #tpu.dot_dimension_numbers<[1], [0], [0], [1], [0, 0, 1, 1], [], []>} : vector<8x32xf32>, vector<32x256xf32>, vector<8x256xf32> -> vector<8x256xf32>
    %29 = arith.addf %24, %28 : vector<8x256xf32>
    %30 = vector.extract_strided_slice %17 {offsets = [16, 0], sizes = [8, 32], strides = [1, 1]} : vector<128x32xf32> to vector<8x32xf32>
    %c2 = arith.constant 2 : index
    %c0_22 = arith.constant 0 : index
    %c0_23 = arith.constant 0 : index
    %31 = vector.load %arg11[%c2, %c0_22, %c0_23] : memref<8x32x256xf32, #tpu.memory_space<vmem>>, vector<1x32x256xf32>
    %32 = vector.shape_cast %31 : vector<1x32x256xf32> to vector<32x256xf32>
    %cst_24 = arith.constant dense<0.000000e+00> : vector<8x256xf32>
    %33 = tpu.matmul %30, %32, %cst_24 {dimension_numbers = #tpu.dot_dimension_numbers<[1], [0], [0], [1], [0, 0, 1, 1], [], []>} : vector<8x32xf32>, vector<32x256xf32>, vector<8x256xf32> -> vector<8x256xf32>
    %34 = arith.addf %29, %33 : vector<8x256xf32>
    %35 = vector.extract_strided_slice %17 {offsets = [24, 0], sizes = [8, 32], strides = [1, 1]} : vector<128x32xf32> to vector<8x32xf32>
    %c3 = arith.constant 3 : index
    %c0_25 = arith.constant 0 : index
    %c0_26 = arith.constant 0 : index
    %36 = vector.load %arg11[%c3, %c0_25, %c0_26] : memref<8x32x256xf32, #tpu.memory_space<vmem>>, vector<1x32x256xf32>
    %37 = vector.shape_cast %36 : vector<1x32x256xf32> to vector<32x256xf32>
    %cst_27 = arith.constant dense<0.000000e+00> : vector<8x256xf32>
    %38 = tpu.matmul %35, %37, %cst_27 {dimension_numbers = #tpu.dot_dimension_numbers<[1], [0], [0], [1], [0, 0, 1, 1], [], []>} : vector<8x32xf32>, vector<32x256xf32>, vector<8x256xf32> -> vector<8x256xf32>
    %39 = arith.addf %34, %38 : vector<8x256xf32>
    %40 = vector.extract_strided_slice %17 {offsets = [32, 0], sizes = [8, 32], strides = [1, 1]} : vector<128x32xf32> to vector<8x32xf32>
    %c4 = arith.constant 4 : index
    %c0_28 = arith.constant 0 : index
    %c0_29 = arith.constant 0 : index
    %41 = vector.load %arg11[%c4, %c0_28, %c0_29] : memref<8x32x256xf32, #tpu.memory_space<vmem>>, vector<1x32x256xf32>
    %42 = vector.shape_cast %41 : vector<1x32x256xf32> to vector<32x256xf32>
    %cst_30 = arith.constant dense<0.000000e+00> : vector<8x256xf32>
    %43 = tpu.matmul %40, %42, %cst_30 {dimension_numbers = #tpu.dot_dimension_numbers<[1], [0], [0], [1], [0, 0, 1, 1], [], []>} : vector<8x32xf32>, vector<32x256xf32>, vector<8x256xf32> -> vector<8x256xf32>
    %44 = arith.addf %39, %43 : vector<8x256xf32>
    %45 = vector.extract_strided_slice %17 {offsets = [40, 0], sizes = [8, 32], strides = [1, 1]} : vector<128x32xf32> to vector<8x32xf32>
    %c5 = arith.constant 5 : index
    %c0_31 = arith.constant 0 : index
    %c0_32 = arith.constant 0 : index
    %46 = vector.load %arg11[%c5, %c0_31, %c0_32] : memref<8x32x256xf32, #tpu.memory_space<vmem>>, vector<1x32x256xf32>
    %47 = vector.shape_cast %46 : vector<1x32x256xf32> to vector<32x256xf32>
    %cst_33 = arith.constant dense<0.000000e+00> : vector<8x256xf32>
    %48 = tpu.matmul %45, %47, %cst_33 {dimension_numbers = #tpu.dot_dimension_numbers<[1], [0], [0], [1], [0, 0, 1, 1], [], []>} : vector<8x32xf32>, vector<32x256xf32>, vector<8x256xf32> -> vector<8x256xf32>
    %49 = arith.addf %44, %48 : vector<8x256xf32>
    %50 = vector.extract_strided_slice %17 {offsets = [48, 0], sizes = [8, 32], strides = [1, 1]} : vector<128x32xf32> to vector<8x32xf32>
    %c6 = arith.constant 6 : index
    %c0_34 = arith.constant 0 : index
    %c0_35 = arith.constant 0 : index
    %51 = vector.load %arg11[%c6, %c0_34, %c0_35] : memref<8x32x256xf32, #tpu.memory_space<vmem>>, vector<1x32x256xf32>
    %52 = vector.shape_cast %51 : vector<1x32x256xf32> to vector<32x256xf32>
    %cst_36 = arith.constant dense<0.000000e+00> : vector<8x256xf32>
    %53 = tpu.matmul %50, %52, %cst_36 {dimension_numbers = #tpu.dot_dimension_numbers<[1], [0], [0], [1], [0, 0, 1, 1], [], []>} : vector<8x32xf32>, vector<32x256xf32>, vector<8x256xf32> -> vector<8x256xf32>
    %54 = arith.addf %49, %53 : vector<8x256xf32>
    %55 = vector.extract_strided_slice %17 {offsets = [56, 0], sizes = [8, 32], strides = [1, 1]} : vector<128x32xf32> to vector<8x32xf32>
    %c7 = arith.constant 7 : index
    %c0_37 = arith.constant 0 : index
    %c0_38 = arith.constant 0 : index
    %56 = vector.load %arg11[%c7, %c0_37, %c0_38] : memref<8x32x256xf32, #tpu.memory_space<vmem>>, vector<1x32x256xf32>
    %57 = vector.shape_cast %56 : vector<1x32x256xf32> to vector<32x256xf32>
    %cst_39 = arith.constant dense<0.000000e+00> : vector<8x256xf32>
    %58 = tpu.matmul %55, %57, %cst_39 {dimension_numbers = #tpu.dot_dimension_numbers<[1], [0], [0], [1], [0, 0, 1, 1], [], []>} : vector<8x32xf32>, vector<32x256xf32>, vector<8x256xf32> -> vector<8x256xf32>
    %59 = arith.addf %54, %58 : vector<8x256xf32>
    %60 = arith.mulf %59, %18 : vector<8x256xf32>
    %cst_40 = arith.constant dense<0.000000e+00> : vector<256xf32>
    %61 = vector.multi_reduction <add>, %60, %cst_40 [0] : vector<8x256xf32> to vector<256xf32>
    %62 = vector.shape_cast %61 : vector<256xf32> to vector<1x256xf32>
    %cst_41 = arith.constant 0.000000e+00 : f32
    %63 = vector.broadcast %cst_41 : f32 to vector<8x256xf32>
    %64 = vector.extract_strided_slice %17 {offsets = [64, 0], sizes = [8, 32], strides = [1, 1]} : vector<128x32xf32> to vector<8x32xf32>
    %c0_42 = arith.constant 0 : index
    %c0_43 = arith.constant 0 : index
    %c0_44 = arith.constant 0 : index
    %65 = vector.load %arg11[%c0_42, %c0_43, %c0_44] : memref<8x32x256xf32, #tpu.memory_space<vmem>>, vector<1x32x256xf32>
    %66 = vector.shape_cast %65 : vector<1x32x256xf32> to vector<32x256xf32>
    %cst_45 = arith.constant dense<0.000000e+00> : vector<8x256xf32>
    %67 = tpu.matmul %64, %66, %cst_45 {dimension_numbers = #tpu.dot_dimension_numbers<[1], [0], [0], [1], [0, 0, 1, 1], [], []>} : vector<8x32xf32>, vector<32x256xf32>, vector<8x256xf32> -> vector<8x256xf32>
    %68 = arith.addf %63, %67 : vector<8x256xf32>
    %69 = vector.extract_strided_slice %17 {offsets = [72, 0], sizes = [8, 32], strides = [1, 1]} : vector<128x32xf32> to vector<8x32xf32>
    %c1_46 = arith.constant 1 : index
    %c0_47 = arith.constant 0 : index
    %c0_48 = arith.constant 0 : index
    %70 = vector.load %arg11[%c1_46, %c0_47, %c0_48] : memref<8x32x256xf32, #tpu.memory_space<vmem>>, vector<1x32x256xf32>
    %71 = vector.shape_cast %70 : vector<1x32x256xf32> to vector<32x256xf32>
    %cst_49 = arith.constant dense<0.000000e+00> : vector<8x256xf32>
    %72 = tpu.matmul %69, %71, %cst_49 {dimension_numbers = #tpu.dot_dimension_numbers<[1], [0], [0], [1], [0, 0, 1, 1], [], []>} : vector<8x32xf32>, vector<32x256xf32>, vector<8x256xf32> -> vector<8x256xf32>
    %73 = arith.addf %68, %72 : vector<8x256xf32>
    %74 = vector.extract_strided_slice %17 {offsets = [80, 0], sizes = [8, 32], strides = [1, 1]} : vector<128x32xf32> to vector<8x32xf32>
    %c2_50 = arith.constant 2 : index
    %c0_51 = arith.constant 0 : index
    %c0_52 = arith.constant 0 : index
    %75 = vector.load %arg11[%c2_50, %c0_51, %c0_52] : memref<8x32x256xf32, #tpu.memory_space<vmem>>, vector<1x32x256xf32>
    %76 = vector.shape_cast %75 : vector<1x32x256xf32> to vector<32x256xf32>
    %cst_53 = arith.constant dense<0.000000e+00> : vector<8x256xf32>
    %77 = tpu.matmul %74, %76, %cst_53 {dimension_numbers = #tpu.dot_dimension_numbers<[1], [0], [0], [1], [0, 0, 1, 1], [], []>} : vector<8x32xf32>, vector<32x256xf32>, vector<8x256xf32> -> vector<8x256xf32>
    %78 = arith.addf %73, %77 : vector<8x256xf32>
    %79 = vector.extract_strided_slice %17 {offsets = [88, 0], sizes = [8, 32], strides = [1, 1]} : vector<128x32xf32> to vector<8x32xf32>
    %c3_54 = arith.constant 3 : index
    %c0_55 = arith.constant 0 : index
    %c0_56 = arith.constant 0 : index
    %80 = vector.load %arg11[%c3_54, %c0_55, %c0_56] : memref<8x32x256xf32, #tpu.memory_space<vmem>>, vector<1x32x256xf32>
    %81 = vector.shape_cast %80 : vector<1x32x256xf32> to vector<32x256xf32>
    %cst_57 = arith.constant dense<0.000000e+00> : vector<8x256xf32>
    %82 = tpu.matmul %79, %81, %cst_57 {dimension_numbers = #tpu.dot_dimension_numbers<[1], [0], [0], [1], [0, 0, 1, 1], [], []>} : vector<8x32xf32>, vector<32x256xf32>, vector<8x256xf32> -> vector<8x256xf32>
    %83 = arith.addf %78, %82 : vector<8x256xf32>
    %84 = vector.extract_strided_slice %17 {offsets = [96, 0], sizes = [8, 32], strides = [1, 1]} : vector<128x32xf32> to vector<8x32xf32>
    %c4_58 = arith.constant 4 : index
    %c0_59 = arith.constant 0 : index
    %c0_60 = arith.constant 0 : index
    %85 = vector.load %arg11[%c4_58, %c0_59, %c0_60] : memref<8x32x256xf32, #tpu.memory_space<vmem>>, vector<1x32x256xf32>
    %86 = vector.shape_cast %85 : vector<1x32x256xf32> to vector<32x256xf32>
    %cst_61 = arith.constant dense<0.000000e+00> : vector<8x256xf32>
    %87 = tpu.matmul %84, %86, %cst_61 {dimension_numbers = #tpu.dot_dimension_numbers<[1], [0], [0], [1], [0, 0, 1, 1], [], []>} : vector<8x32xf32>, vector<32x256xf32>, vector<8x256xf32> -> vector<8x256xf32>
    %88 = arith.addf %83, %87 : vector<8x256xf32>
    %89 = vector.extract_strided_slice %17 {offsets = [104, 0], sizes = [8, 32], strides = [1, 1]} : vector<128x32xf32> to vector<8x32xf32>
    %c5_62 = arith.constant 5 : index
    %c0_63 = arith.constant 0 : index
    %c0_64 = arith.constant 0 : index
    %90 = vector.load %arg11[%c5_62, %c0_63, %c0_64] : memref<8x32x256xf32, #tpu.memory_space<vmem>>, vector<1x32x256xf32>
    %91 = vector.shape_cast %90 : vector<1x32x256xf32> to vector<32x256xf32>
    %cst_65 = arith.constant dense<0.000000e+00> : vector<8x256xf32>
    %92 = tpu.matmul %89, %91, %cst_65 {dimension_numbers = #tpu.dot_dimension_numbers<[1], [0], [0], [1], [0, 0, 1, 1], [], []>} : vector<8x32xf32>, vector<32x256xf32>, vector<8x256xf32> -> vector<8x256xf32>
    %93 = arith.addf %88, %92 : vector<8x256xf32>
    %94 = vector.extract_strided_slice %17 {offsets = [112, 0], sizes = [8, 32], strides = [1, 1]} : vector<128x32xf32> to vector<8x32xf32>
    %c6_66 = arith.constant 6 : index
    %c0_67 = arith.constant 0 : index
    %c0_68 = arith.constant 0 : index
    %95 = vector.load %arg11[%c6_66, %c0_67, %c0_68] : memref<8x32x256xf32, #tpu.memory_space<vmem>>, vector<1x32x256xf32>
    %96 = vector.shape_cast %95 : vector<1x32x256xf32> to vector<32x256xf32>
    %cst_69 = arith.constant dense<0.000000e+00> : vector<8x256xf32>
    %97 = tpu.matmul %94, %96, %cst_69 {dimension_numbers = #tpu.dot_dimension_numbers<[1], [0], [0], [1], [0, 0, 1, 1], [], []>} : vector<8x32xf32>, vector<32x256xf32>, vector<8x256xf32> -> vector<8x256xf32>
    %98 = arith.addf %93, %97 : vector<8x256xf32>
    %99 = vector.extract_strided_slice %17 {offsets = [120, 0], sizes = [8, 32], strides = [1, 1]} : vector<128x32xf32> to vector<8x32xf32>
    %c7_70 = arith.constant 7 : index
    %c0_71 = arith.constant 0 : index
    %c0_72 = arith.constant 0 : index
    %100 = vector.load %arg11[%c7_70, %c0_71, %c0_72] : memref<8x32x256xf32, #tpu.memory_space<vmem>>, vector<1x32x256xf32>
    %101 = vector.shape_cast %100 : vector<1x32x256xf32> to vector<32x256xf32>
    %cst_73 = arith.constant dense<0.000000e+00> : vector<8x256xf32>
    %102 = tpu.matmul %99, %101, %cst_73 {dimension_numbers = #tpu.dot_dimension_numbers<[1], [0], [0], [1], [0, 0, 1, 1], [], []>} : vector<8x32xf32>, vector<32x256xf32>, vector<8x256xf32> -> vector<8x256xf32>
    %103 = arith.addf %98, %102 : vector<8x256xf32>
    %104 = arith.mulf %103, %18 : vector<8x256xf32>
    %cst_74 = arith.constant dense<0.000000e+00> : vector<256xf32>
    %105 = vector.multi_reduction <add>, %104, %cst_74 [0] : vector<8x256xf32> to vector<256xf32>
    %106 = vector.shape_cast %105 : vector<256xf32> to vector<1x256xf32>
    %107 = tpu.concatenate %62, %106 in 0 : vector<1x256xf32>, vector<1x256xf32> -> vector<2x256xf32>
    %108 = vector.extract_strided_slice %107 {offsets = [0, 0], sizes = [2, 32], strides = [1, 1]} : vector<2x256xf32> to vector<2x32xf32>
    %109 = vector.extract_strided_slice %107 {offsets = [0, 32], sizes = [2, 32], strides = [1, 1]} : vector<2x256xf32> to vector<2x32xf32>
    %110 = arith.addf %108, %109 : vector<2x32xf32>
    %111 = vector.extract_strided_slice %107 {offsets = [0, 64], sizes = [2, 32], strides = [1, 1]} : vector<2x256xf32> to vector<2x32xf32>
    %112 = arith.addf %110, %111 : vector<2x32xf32>
    %113 = vector.extract_strided_slice %107 {offsets = [0, 96], sizes = [2, 32], strides = [1, 1]} : vector<2x256xf32> to vector<2x32xf32>
    %114 = arith.addf %112, %113 : vector<2x32xf32>
    %115 = vector.extract_strided_slice %107 {offsets = [0, 128], sizes = [2, 32], strides = [1, 1]} : vector<2x256xf32> to vector<2x32xf32>
    %116 = arith.addf %114, %115 : vector<2x32xf32>
    %117 = vector.extract_strided_slice %107 {offsets = [0, 160], sizes = [2, 32], strides = [1, 1]} : vector<2x256xf32> to vector<2x32xf32>
    %118 = arith.addf %116, %117 : vector<2x32xf32>
    %119 = vector.extract_strided_slice %107 {offsets = [0, 192], sizes = [2, 32], strides = [1, 1]} : vector<2x256xf32> to vector<2x32xf32>
    %120 = arith.addf %118, %119 : vector<2x32xf32>
    %121 = vector.extract_strided_slice %107 {offsets = [0, 224], sizes = [2, 32], strides = [1, 1]} : vector<2x256xf32> to vector<2x32xf32>
    %122 = arith.addf %120, %121 : vector<2x32xf32>
    %c0_75 = arith.constant 0 : index
    %c0_76 = arith.constant 0 : index
    %123 = vector.load %arg6[%c0_75, %c0_76] : memref<1x32xf32, #tpu.memory_space<vmem>>, vector<1x32xf32>
    %124 = vector.broadcast %123 : vector<1x32xf32> to vector<2x32xf32>
    %125 = arith.addf %122, %124 : vector<2x32xf32>
    %cst_77 = arith.constant 0.000000e+00 : f32
    %126 = vector.broadcast %cst_77 : f32 to vector<2x32xf32>
    %127 = arith.maximumf %125, %126 : vector<2x32xf32>
    %c0_78 = arith.constant 0 : index
    %c0_79 = arith.constant 0 : index
    %128 = vector.load %arg7[%c0_78, %c0_79] : memref<1x32xf32, #tpu.memory_space<vmem>>, vector<1x32xf32>
    %129 = vector.broadcast %128 : vector<1x32xf32> to vector<2x32xf32>
    %130 = arith.mulf %127, %129 : vector<2x32xf32>
    %cst_80 = arith.constant dense<0.000000e+00> : vector<2xf32>
    %131 = vector.multi_reduction <add>, %130, %cst_80 [1] : vector<2x32xf32> to vector<2xf32>
    %132 = vector.shape_cast %131 : vector<2xf32> to vector<2x1xf32>
    %c0_81 = arith.constant 0 : index
    %c0_82 = arith.constant 0 : index
    %133 = vector.load %arg8[%c0_81, %c0_82] : memref<1x1xf32, #tpu.memory_space<vmem>>, vector<1x1xf32>
    %134 = vector.broadcast %133 : vector<1x1xf32> to vector<2x1xf32>
    %135 = arith.addf %132, %134 : vector<2x1xf32>
    %c0_83 = arith.constant 0 : index
    %c0_84 = arith.constant 0 : index
    %136 = vector.load %arg10[%c0_83, %c0_84] : memref<2x1xf32, #tpu.memory_space<vmem>>, vector<2x1xf32>
    tpu.vector_store %arg10[%c0_83, %c0_84], %135 {strides = array<i32>} : memref<2x1xf32, #tpu.memory_space<vmem>>, vector<2x1xf32>,
    return
  }
}

</mosaic_0001>

<llo_original>
// kernel: multiplicative_basic_critic.1
$region0: #{multiplicative_basic_critic.1}
  #allocation0 [shape = 'u32[]', space=smem, size = 0x4, offset = 0x4, fixed_abs, tag = 'smem constant byte address 0x4 - core index']
  #allocation1 [shape = 'u32[144,128]{1,0:T(1,128)}', space=vmem, size = 0x12000, scoped, tag = 'internal scratch']
  #allocation2 [shape = 'f32[8,32,256]{2,1,0:T(8,128)}', space=vmem, size = 0x40000, scoped, tag = 'scratch operand']
  #allocation3 [shape = 's32[1]{0}', space=sflag, size = 0x4, scoped, tag = 'scratch operand']
  #allocation4 [shape = 'f32[1,1]{1,0:T(1,128)S(1)}', space=vmem, size = 0x200, scoped, tag = 'scoped memory for multiplicative_basic_critic.1']
  #allocation5 [shape = 's32[]', space=sflag, size = 0x4, offset = 0, fixed_abs, tag = 'sflag constant byte address 0x0 - dummy sync flag']
  #allocation6 [shape = 's32[]', space=sflag, size = 0x4, offset = 0, fixed_abs, tag = 'sflag constant byte address 0x0 - dummy sync flag']
  #allocation7 [shape = 'u32[]', space=smem, size = 0x4, offset = 0x44, fixed_abs, tag = 'smem constant byte address 0x44 - assertion arg 0']
  #allocation8 [shape = 'u32[]', space=smem, size = 0x4, offset = 0x48, fixed_abs, tag = 'smem constant byte address 0x48 - assertion arg 1']
  %s0 = inlined_call_operand.vmem [shape: f32[128,4], index: 0, kind: input, shape index: {}]
  %s1 = inlined_call_operand.vmem [shape: f32[4,8], index: 1, kind: input, shape index: {}]
  %s2 = inlined_call_operand.vmem [shape: f32[1,8], index: 2, kind: input, shape index: {}]
  %s3 = inlined_call_operand.vmem [shape: f32[8,64], index: 3, kind: input, shape index: {}]
  %s4 = inlined_call_operand.vmem [shape: f32[1,64], index: 4, kind: input, shape index: {}]
  %s5 = inlined_call_operand.hbm [shape: f32[8,32,256], index: 5, kind: input, shape index: {}]
  %s6 = inlined_call_operand.vmem [shape: f32[1,32], index: 6, kind: input, shape index: {}]
  %s7 = inlined_call_operand.vmem [shape: f32[1,32], index: 7, kind: input, shape index: {}]
  %s8 = inlined_call_operand.<no memory space> [shape: f32[1,1], index: 8, kind: input, shape index: {}]
  %s9 = inlined_call_operand.vmem [shape: f32[8,256], index: 9, kind: input, shape index: {}]
  %s10 = inlined_call_operand.vmem [shape: f32[2,1], index: 10, kind: output, shape index: {}]
  %s11 = sld [smem:[#allocation0]]
  $region50: #{multiplicative_basic_critic.1} parent=0
    _
  %s13 = ssub.s32 1, %s11
  %s14 = scalar_select 0, %s13, %s11
  %v15 = vstv %s8
  %16 = vst [vmem:[#allocation4] sm:$0x1] %v15
  // Predicated region
  $region2: #{multiplicative_basic_critic.1} parent=0 // pred_check
    _
  $region3: #{multiplicative_basic_critic.1} parent=0 // pred_check_branch
    %18 = sbr.rel (0) target = $region5
  $region4: #{multiplicative_basic_critic.1} parent=0 // pred_region
    _
  $region5: #{multiplicative_basic_critic.1} parent=0 // pred_fallthru
    _
  // Predicated region
  $region6: #{multiplicative_basic_critic.1} parent=0 // pred_check
    _
  $region7: #{multiplicative_basic_critic.1} parent=0 // pred_check_branch
    %20 = sbr.rel (0) target = $region9
  $region8: #{multiplicative_basic_critic.1} parent=0 // pred_region
    _
  $region9: #{multiplicative_basic_critic.1} parent=0 // pred_fallthru
    _
  // Predicated region
  $region10: #{multiplicative_basic_critic.1} parent=0 // pred_check
    _
  $region11: #{multiplicative_basic_critic.1} parent=0 // pred_check_branch
    %22 = sbr.rel (0) target = $region13
  $region12: #{multiplicative_basic_critic.1} parent=0 // pred_region
    _
  $region13: #{multiplicative_basic_critic.1} parent=0 // pred_fallthru
    _
  // Predicated region
  $region14: #{multiplicative_basic_critic.1} parent=0 // pred_check
    _
  $region15: #{multiplicative_basic_critic.1} parent=0 // pred_check_branch
    %24 = sbr.rel (0) target = $region17
  $region16: #{multiplicative_basic_critic.1} parent=0 // pred_region
    _
  $region17: #{multiplicative_basic_critic.1} parent=0 // pred_fallthru
    _
  // Predicated region
  $region18: #{multiplicative_basic_critic.1} parent=0 // pred_check
    _
  $region19: #{multiplicative_basic_critic.1} parent=0 // pred_check_branch
    %26 = sbr.rel (0) target = $region21
  $region20: #{multiplicative_basic_critic.1} parent=0 // pred_region
    _
  $region21: #{multiplicative_basic_critic.1} parent=0 // pred_fallthru
    _
  // Predicated region
  $region22: #{multiplicative_basic_critic.1} parent=0 // pred_check
    _
  $region23: #{multiplicative_basic_critic.1} parent=0 // pred_check_branch
    %28 = sbr.rel (0) target = $region25
  $region24: #{multiplicative_basic_critic.1} parent=0 // pred_region
    _
  $region25: #{multiplicative_basic_critic.1} parent=0 // pred_fallthru
    _
  // Predicated region
  $region26: #{multiplicative_basic_critic.1} parent=0 // pred_check
    _
  $region27: #{multiplicative_basic_critic.1} parent=0 // pred_check_branch
    %30 = sbr.rel (0) target = $region29
  $region28: #{multiplicative_basic_critic.1} parent=0 // pred_region
    _
  $region29: #{multiplicative_basic_critic.1} parent=0 // pred_fallthru
    _
  // Predicated region
  $region30: #{multiplicative_basic_critic.1} parent=0 // pred_check
    _
  $region31: #{multiplicative_basic_critic.1} parent=0 // pred_check_branch
    %32 = sbr.rel (0) target = $region33
  $region32: #{multiplicative_basic_critic.1} parent=0 // pred_region
    _
  $region33: #{multiplicative_basic_critic.1} parent=0 // pred_fallthru
    _
  // Predicated region
  $region34: #{multiplicative_basic_critic.1} parent=0 // pred_check
    _
  $region35: #{multiplicative_basic_critic.1} parent=0 // pred_check_branch
    %34 = sbr.rel (0) target = $region37
  $region36: #{multiplicative_basic_critic.1} parent=0 // pred_region
    _
  $region37: #{multiplicative_basic_critic.1} parent=0 // pred_fallthru
    _
  // Predicated region
  $region38: #{multiplicative_basic_critic.1} parent=0 // pred_check
    _
  $region39: #{multiplicative_basic_critic.1} parent=0 // pred_check_branch
    %36 = sbr.rel target = $region41
  $region40: #{multiplicative_basic_critic.1} parent=0 // pred_region
    %37 = sst [smem:[#allocation7]] [#allocation6]
    %38 = sst [smem:[#allocation8]] [#allocation5]
  $region41: #{multiplicative_basic_critic.1} parent=0 // pred_fallthru
    _
  %40 = shalt.err (0)
  %s42 = sshll.u32 [#allocation2], 4
  %s43 = int_to_ptr.vmem [resolvable:$true] %s42
  %45 = dma.hbm_to_vmem [thread:$0]  %s5, 8192, %s43, [#allocation3]
  %v46 = vld [vmem:[%s0] sm:$0xff]
  %v47 = vld [vmem:[%s0 + $0x8] sm:$0xff]
  %v48 = vld [vmem:[%s0 + $0x10] sm:$0xff]
  %v49 = vld [vmem:[%s0 + $0x18] sm:$0xff]
  %v50 = vld [vmem:[%s0 + $0x20] sm:$0xff]
  %v51 = vld [vmem:[%s0 + $0x28] sm:$0xff]
  %v52 = vld [vmem:[%s0 + $0x30] sm:$0xff]
  %v53 = vld [vmem:[%s0 + $0x38] sm:$0xff]
  %v54 = vld [vmem:[%s0 + $0x40] sm:$0xff]
  %v55 = vld [vmem:[%s0 + $0x48] sm:$0xff]
  %v56 = vld [vmem:[%s0 + $0x50] sm:$0xff]
  %v57 = vld [vmem:[%s0 + $0x58] sm:$0xff]
  %v58 = vld [vmem:[%s0 + $0x60] sm:$0xff]
  %v59 = vld [vmem:[%s0 + $0x68] sm:$0xff]
  %v60 = vld [vmem:[%s0 + $0x70] sm:$0xff]
  %v61 = vld [vmem:[%s0 + $0x78] sm:$0xff]
  %v62 = vld [vmem:[%s1] sm:$0xf]
  %v63 = vld [vmem:[%s2] sm:$0x1]
  %v65 = vlaneseq
  %v66 = vshrl.u32 %v65, 7
  %v67 = vsub.s32 0, %v66
  %v68 = vrot.slane %v63, %v67
  %vm70 = vcmask 31744
  %v72 = vsel %vm70, %v46, 0
  %v75 = vsel %vm70, %v47, 0
  %v78 = vsel %vm70, %v48, 0
  %v81 = vsel %vm70, %v49, 0
  %v84 = vsel %vm70, %v50, 0
  %v87 = vsel %vm70, %v51, 0
  %v90 = vsel %vm70, %v52, 0
  %v93 = vsel %vm70, %v53, 0
  %v96 = vsel %vm70, %v54, 0
  %v99 = vsel %vm70, %v55, 0
  %v102 = vsel %vm70, %v56, 0
  %v105 = vsel %vm70, %v57, 0
  %v108 = vsel %vm70, %v58, 0
  %v111 = vsel %vm70, %v59, 0
  %v114 = vsel %vm70, %v60, 0
  %v117 = vsel %vm70, %v61, 0
  %vm119 = vcmask 1043456
  %v121 = vsel %vm119, %v62, 0
  %123 = vmatprep.subr.mxu0 0.0
  %124 = vmatpush1.msra.mxu0 %v121
  %125 = vmatprep.subr.mxu0 0.0
  %126 = vmatpush1.msra.mxu0 0.0
  %127 = vmatprep.subr.mxu0 0.0
  %128 = vmatpush1.msra.mxu0 0.0
  %129 = vmatprep.subr.mxu0 0.0
  %130 = vmatpush1.msra.mxu0 0.0
  %131 = vmatprep.subr.mxu0 0.0
  %132 = vmatpush1.msra.mxu0 0.0
  %133 = vmatprep.subr.mxu0 0.0
  %134 = vmatpush1.msra.mxu0 0.0
  %135 = vmatprep.subr.mxu0 0.0
  %136 = vmatpush1.msra.mxu0 0.0
  %137 = vmatprep.subr.mxu0 0.0
  %138 = vmatpush1.msra.mxu0 0.0
  %139 = vmatprep.subr.mxu0 0.0
  %140 = vmatpush1.msra.mxu0 0.0
  %141 = vmatprep.subr.mxu0 0.0
  %142 = vmatpush1.msra.mxu0 0.0
  %143 = vmatprep.subr.mxu0 0.0
  %144 = vmatpush1.msra.mxu0 0.0
  %145 = vmatprep.subr.mxu0 0.0
  %146 = vmatpush1.msra.mxu0 0.0
  %147 = vmatprep.subr.mxu0 0.0
  %148 = vmatpush1.msra.mxu0 0.0
  %149 = vmatprep.subr.mxu0 0.0
  %150 = vmatpush1.msra.mxu0 0.0
  %151 = vmatprep.subr.mxu0 0.0
  %152 = vmatpush1.msra.mxu0 0.0
  %153 = vmatprep.subr.mxu0 0.0
  %154 = vmatpush1.msra.mxu0 0.0
  %155 = vmatprep.subr.mxu0 0.0
  %156 = vmatpush1.msra.mxu0 0.0
  %157 = vmatprep.subr.mxu0 0.0
  %158 = vmatpush1.msra.mxu0 0.0
  %159 = vmatprep.subr.mxu0 0.0
  %160 = vmatpush1.msra.mxu0 0.0
  %161 = vmatprep.subr.mxu0 0.0
  %162 = vmatpush1.msra.mxu0 0.0
  %163 = vmatprep.subr.mxu0 0.0
  %164 = vmatpush1.msra.mxu0 0.0
  %165 = vmatprep.subr.mxu0 0.0
  %166 = vmatpush1.msra.mxu0 0.0
  %167 = vmatprep.subr.mxu0 0.0
  %168 = vmatpush1.msra.mxu0 0.0
  %169 = vmatprep.subr.mxu0 0.0
  %170 = vmatpush1.msra.mxu0 0.0
  %171 = vmatprep.subr.mxu0 0.0
  %172 = vmatpush1.msra.mxu0 0.0
  %173 = vmatprep.subr.mxu0 0.0
  %174 = vmatpush1.msra.mxu0 0.0
  %175 = vmatprep.subr.mxu0 0.0
  %176 = vmatpush1.msra.mxu0 0.0
  %177 = vmatprep.subr.mxu0 0.0
  %178 = vmatpush1.msra.mxu0 0.0
  %179 = vmatprep.subr.mxu0 0.0
  %180 = vmatpush1.msra.mxu0 0.0
  %181 = vmatprep.subr.mxu0 0.0
  %182 = vmatpush1.msra.mxu0 0.0
  %183 = vmatprep.subr.mxu0 0.0
  %184 = vmatpush1.msra.mxu0 0.0
  %185 = vmatprep.subr.mxu0 0.0
  %186 = vmatpush1.msra.mxu0 0.0
  %187 = vmatprep.mubr.f32.mxu0 0.0
  %188 = vmatmul.mubr.f32.gmra.mrb[0].mxu0 %v72
  %v189 = vpop.f32.mrb[0].mxu0
  %v190 = vadd.f32 %v68, %v189
  %v191 = vpop.f32.mrb[0].mxu0
  %192 = vmatprep.mubr.f32.mxu0 0.0
  %193 = vmatmul.mubr.f32.gmra.mrb[0].mxu0 %v75
  %v194 = vpop.f32.mrb[0].mxu0
  %v195 = vadd.f32 %v68, %v194
  %v196 = vpop.f32.mrb[0].mxu0
  %197 = vmatprep.mubr.f32.mxu0 0.0
  %198 = vmatmul.mubr.f32.gmra.mrb[0].mxu0 %v78
  %v199 = vpop.f32.mrb[0].mxu0
  %v200 = vadd.f32 %v68, %v199
  %v201 = vpop.f32.mrb[0].mxu0
  %202 = vmatprep.mubr.f32.mxu0 0.0
  %203 = vmatmul.mubr.f32.gmra.mrb[0].mxu0 %v81
  %v204 = vpop.f32.mrb[0].mxu0
  %v205 = vadd.f32 %v68, %v204
  %v206 = vpop.f32.mrb[0].mxu0
  %207 = vmatprep.mubr.f32.mxu0 0.0
  %208 = vmatmul.mubr.f32.gmra.mrb[0].mxu0 %v84
  %v209 = vpop.f32.mrb[0].mxu0
  %v210 = vadd.f32 %v68, %v209
  %v211 = vpop.f32.mrb[0].mxu0
  %212 = vmatprep.mubr.f32.mxu0 0.0
  %213 = vmatmul.mubr.f32.gmra.mrb[0].mxu0 %v87
  %v214 = vpop.f32.mrb[0].mxu0
  %v215 = vadd.f32 %v68, %v214
  %v216 = vpop.f32.mrb[0].mxu0
  %217 = vmatprep.mubr.f32.mxu0 0.0
  %218 = vmatmul.mubr.f32.gmra.mrb[0].mxu0 %v90
  %v219 = vpop.f32.mrb[0].mxu0
  %v220 = vadd.f32 %v68, %v219
  %v221 = vpop.f32.mrb[0].mxu0
  %222 = vmatprep.mubr.f32.mxu0 0.0
  %223 = vmatmul.mubr.f32.gmra.mrb[0].mxu0 %v93
  %v224 = vpop.f32.mrb[0].mxu0
  %v225 = vadd.f32 %v68, %v224
  %v226 = vpop.f32.mrb[0].mxu0
  %227 = vmatprep.mubr.f32.mxu0 0.0
  %228 = vmatmul.mubr.f32.gmra.mrb[0].mxu0 %v96
  %v229 = vpop.f32.mrb[0].mxu0
  %v230 = vadd.f32 %v68, %v229
  %v231 = vpop.f32.mrb[0].mxu0
  %232 = vmatprep.mubr.f32.mxu0 0.0
  %233 = vmatmul.mubr.f32.gmra.mrb[0].mxu0 %v99
  %v234 = vpop.f32.mrb[0].mxu0
  %v235 = vadd.f32 %v68, %v234
  %v236 = vpop.f32.mrb[0].mxu0
  %237 = vmatprep.mubr.f32.mxu0 0.0
  %238 = vmatmul.mubr.f32.gmra.mrb[0].mxu0 %v102
  %v239 = vpop.f32.mrb[0].mxu0
  %v240 = vadd.f32 %v68, %v239
  %v241 = vpop.f32.mrb[0].mxu0
  %242 = vmatprep.mubr.f32.mxu0 0.0
  %243 = vmatmul.mubr.f32.gmra.mrb[0].mxu0 %v105
  %v244 = vpop.f32.mrb[0].mxu0
  %v245 = vadd.f32 %v68, %v244
  %v246 = vpop.f32.mrb[0].mxu0
  %247 = vmatprep.mubr.f32.mxu0 0.0
  %248 = vmatmul.mubr.f32.gmra.mrb[0].mxu0 %v108
  %v249 = vpop.f32.mrb[0].mxu0
  %v250 = vadd.f32 %v68, %v249
  %v251 = vpop.f32.mrb[0].mxu0
  %252 = vmatprep.mubr.f32.mxu0 0.0
  %253 = vmatmul.mubr.f32.gmra.mrb[0].mxu0 %v111
  %v254 = vpop.f32.mrb[0].mxu0
  %v255 = vadd.f32 %v68, %v254
  %v256 = vpop.f32.mrb[0].mxu0
  %257 = vmatprep.mubr.f32.mxu0 0.0
  %258 = vmatmul.mubr.f32.gmra.mrb[0].mxu0 %v114
  %v259 = vpop.f32.mrb[0].mxu0
  %v260 = vadd.f32 %v68, %v259
  %v261 = vpop.f32.mrb[0].mxu0
  %262 = vmatprep.mubr.f32.mxu0 0.0
  %263 = vmatmul.mubr.f32.gmra.mrb[0].mxu0 %v117
  %v264 = vpop.f32.mrb[0].mxu0
  %v265 = vadd.f32 %v68, %v264
  %v266 = vpop.f32.mrb[0].mxu0
  %267 = vdwg.mxu0
  %v268 = vmax.f32 %v190, 0.0
  %v269 = vmax.f32 %v195, 0.0
  %v270 = vmax.f32 %v200, 0.0
  %v271 = vmax.f32 %v205, 0.0
  %v272 = vmax.f32 %v210, 0.0
  %v273 = vmax.f32 %v215, 0.0
  %v274 = vmax.f32 %v220, 0.0
  %v275 = vmax.f32 %v225, 0.0
  %v276 = vmax.f32 %v230, 0.0
  %v277 = vmax.f32 %v235, 0.0
  %v278 = vmax.f32 %v240, 0.0
  %v279 = vmax.f32 %v245, 0.0
  %v280 = vmax.f32 %v250, 0.0
  %v281 = vmax.f32 %v255, 0.0
  %v282 = vmax.f32 %v260, 0.0
  %v283 = vmax.f32 %v265, 0.0
  %v284 = vld [vmem:[%s3] sm:$0xff]
  %v285 = vld [vmem:[%s4] sm:$0x1]
  %v287 = vlaneseq
  %v288 = vshrl.u32 %v287, 7
  %v289 = vsub.s32 0, %v288
  %v290 = vrot.slane %v285, %v289
  %vm292 = vcmask 64512
  %v294 = vsel %vm292, %v268, 0
  %v297 = vsel %vm292, %v269, 0
  %v300 = vsel %vm292, %v270, 0
  %v303 = vsel %vm292, %v271, 0
  %v306 = vsel %vm292, %v272, 0
  %v309 = vsel %vm292, %v273, 0
  %v312 = vsel %vm292, %v274, 0
  %v315 = vsel %vm292, %v275, 0
  %v318 = vsel %vm292, %v276, 0
  %v321 = vsel %vm292, %v277, 0
  %v324 = vsel %vm292, %v278, 0
  %v327 = vsel %vm292, %v279, 0
  %v330 = vsel %vm292, %v280, 0
  %v333 = vsel %vm292, %v281, 0
  %v336 = vsel %vm292, %v282, 0
  %v339 = vsel %vm292, %v283, 0
  %341 = vmatprep.subr.mxu0 0.0
  %342 = vmatpush1.msra.mxu0 %v284
  %343 = vmatprep.subr.mxu0 0.0
  %344 = vmatpush1.msra.mxu0 0.0
  %345 = vmatprep.subr.mxu0 0.0
  %346 = vmatpush1.msra.mxu0 0.0
  %347 = vmatprep.subr.mxu0 0.0
  %348 = vmatpush1.msra.mxu0 0.0
  %349 = vmatprep.subr.mxu0 0.0
  %350 = vmatpush1.msra.mxu0 0.0
  %351 = vmatprep.subr.mxu0 0.0
  %352 = vmatpush1.msra.mxu0 0.0
  %353 = vmatprep.subr.mxu0 0.0
  %354 = vmatpush1.msra.mxu0 0.0
  %355 = vmatprep.subr.mxu0 0.0
  %356 = vmatpush1.msra.mxu0 0.0
  %357 = vmatprep.subr.mxu0 0.0
  %358 = vmatpush1.msra.mxu0 0.0
  %359 = vmatprep.subr.mxu0 0.0
  %360 = vmatpush1.msra.mxu0 0.0
  %361 = vmatprep.subr.mxu0 0.0
  %362 = vmatpush1.msra.mxu0 0.0
  %363 = vmatprep.subr.mxu0 0.0
  %364 = vmatpush1.msra.mxu0 0.0
  %365 = vmatprep.subr.mxu0 0.0
  %366 = vmatpush1.msra.mxu0 0.0
  %367 = vmatprep.subr.mxu0 0.0
  %368 = vmatpush1.msra.mxu0 0.0
  %369 = vmatprep.subr.mxu0 0.0
  %370 = vmatpush1.msra.mxu0 0.0
  %371 = vmatprep.subr.mxu0 0.0
  %372 = vmatpush1.msra.mxu0 0.0
  %373 = vmatprep.subr.mxu0 0.0
  %374 = vmatpush1.msra.mxu0 0.0
  %375 = vmatprep.subr.mxu0 0.0
  %376 = vmatpush1.msra.mxu0 0.0
  %377 = vmatprep.subr.mxu0 0.0
  %378 = vmatpush1.msra.mxu0 0.0
  %379 = vmatprep.subr.mxu0 0.0
  %380 = vmatpush1.msra.mxu0 0.0
  %381 = vmatprep.subr.mxu0 0.0
  %382 = vmatpush1.msra.mxu0 0.0
  %383 = vmatprep.subr.mxu0 0.0
  %384 = vmatpush1.msra.mxu0 0.0
  %385 = vmatprep.subr.mxu0 0.0
  %386 = vmatpush1.msra.mxu0 0.0
  %387 = vmatprep.subr.mxu0 0.0
  %388 = vmatpush1.msra.mxu0 0.0
  %389 = vmatprep.subr.mxu0 0.0
  %390 = vmatpush1.msra.mxu0 0.0
  %391 = vmatprep.subr.mxu0 0.0
  %392 = vmatpush1.msra.mxu0 0.0
  %393 = vmatprep.subr.mxu0 0.0
  %394 = vmatpush1.msra.mxu0 0.0
  %395 = vmatprep.subr.mxu0 0.0
  %396 = vmatpush1.msra.mxu0 0.0
  %397 = vmatprep.subr.mxu0 0.0
  %398 = vmatpush1.msra.mxu0 0.0
  %399 = vmatprep.subr.mxu0 0.0
  %400 = vmatpush1.msra.mxu0 0.0
  %401 = vmatprep.subr.mxu0 0.0
  %402 = vmatpush1.msra.mxu0 0.0
  %403 = vmatprep.subr.mxu0 0.0
  %404 = vmatpush1.msra.mxu0 0.0
  %405 = vmatprep.mubr.f32.mxu0 0.0
  %406 = vmatmul.mubr.f32.gmra.mrb[0].mxu0 %v294
  %v407 = vpop.f32.mrb[0].mxu0
  %v408 = vadd.f32 %v290, %v407
  %v409 = vpop.f32.mrb[0].mxu0
  %410 = vmatprep.mubr.f32.mxu0 0.0
  %411 = vmatmul.mubr.f32.gmra.mrb[0].mxu0 %v297
  %v412 = vpop.f32.mrb[0].mxu0
  %v413 = vadd.f32 %v290, %v412
  %v414 = vpop.f32.mrb[0].mxu0
  %415 = vmatprep.mubr.f32.mxu0 0.0
  %416 = vmatmul.mubr.f32.gmra.mrb[0].mxu0 %v300
  %v417 = vpop.f32.mrb[0].mxu0
  %v418 = vadd.f32 %v290, %v417
  %v419 = vpop.f32.mrb[0].mxu0
  %420 = vmatprep.mubr.f32.mxu0 0.0
  %421 = vmatmul.mubr.f32.gmra.mrb[0].mxu0 %v303
  %v422 = vpop.f32.mrb[0].mxu0
  %v423 = vadd.f32 %v290, %v422
  %v424 = vpop.f32.mrb[0].mxu0
  %425 = vmatprep.mubr.f32.mxu0 0.0
  %426 = vmatmul.mubr.f32.gmra.mrb[0].mxu0 %v306
  %v427 = vpop.f32.mrb[0].mxu0
  %v428 = vadd.f32 %v290, %v427
  %v429 = vpop.f32.mrb[0].mxu0
  %430 = vmatprep.mubr.f32.mxu0 0.0
  %431 = vmatmul.mubr.f32.gmra.mrb[0].mxu0 %v309
  %v432 = vpop.f32.mrb[0].mxu0
  %v433 = vadd.f32 %v290, %v432
  %v434 = vpop.f32.mrb[0].mxu0
  %435 = vmatprep.mubr.f32.mxu0 0.0
  %436 = vmatmul.mubr.f32.gmra.mrb[0].mxu0 %v312
  %v437 = vpop.f32.mrb[0].mxu0
  %v438 = vadd.f32 %v290, %v437
  %v439 = vpop.f32.mrb[0].mxu0
  %440 = vmatprep.mubr.f32.mxu0 0.0
  %441 = vmatmul.mubr.f32.gmra.mrb[0].mxu0 %v315
  %v442 = vpop.f32.mrb[0].mxu0
  %v443 = vadd.f32 %v290, %v442
  %v444 = vpop.f32.mrb[0].mxu0
  %445 = vmatprep.mubr.f32.mxu0 0.0
  %446 = vmatmul.mubr.f32.gmra.mrb[0].mxu0 %v318
  %v447 = vpop.f32.mrb[0].mxu0
  %v448 = vadd.f32 %v290, %v447
  %v449 = vpop.f32.mrb[0].mxu0
  %450 = vmatprep.mubr.f32.mxu0 0.0
  %451 = vmatmul.mubr.f32.gmra.mrb[0].mxu0 %v321
  %v452 = vpop.f32.mrb[0].mxu0
  %v453 = vadd.f32 %v290, %v452
  %v454 = vpop.f32.mrb[0].mxu0
  %455 = vmatprep.mubr.f32.mxu0 0.0
  %456 = vmatmul.mubr.f32.gmra.mrb[0].mxu0 %v324
  %v457 = vpop.f32.mrb[0].mxu0
  %v458 = vadd.f32 %v290, %v457
  %v459 = vpop.f32.mrb[0].mxu0
  %460 = vmatprep.mubr.f32.mxu0 0.0
  %461 = vmatmul.mubr.f32.gmra.mrb[0].mxu0 %v327
  %v462 = vpop.f32.mrb[0].mxu0
  %v463 = vadd.f32 %v290, %v462
  %v464 = vpop.f32.mrb[0].mxu0
  %465 = vmatprep.mubr.f32.mxu0 0.0
  %466 = vmatmul.mubr.f32.gmra.mrb[0].mxu0 %v330
  %v467 = vpop.f32.mrb[0].mxu0
  %v468 = vadd.f32 %v290, %v467
  %v469 = vpop.f32.mrb[0].mxu0
  %470 = vmatprep.mubr.f32.mxu0 0.0
  %471 = vmatmul.mubr.f32.gmra.mrb[0].mxu0 %v333
  %v472 = vpop.f32.mrb[0].mxu0
  %v473 = vadd.f32 %v290, %v472
  %v474 = vpop.f32.mrb[0].mxu0
  %475 = vmatprep.mubr.f32.mxu0 0.0
  %476 = vmatmul.mubr.f32.gmra.mrb[0].mxu0 %v336
  %v477 = vpop.f32.mrb[0].mxu0
  %v478 = vadd.f32 %v290, %v477
  %v479 = vpop.f32.mrb[0].mxu0
  %480 = vmatprep.mubr.f32.mxu0 0.0
  %481 = vmatmul.mubr.f32.gmra.mrb[0].mxu0 %v339
  %v482 = vpop.f32.mrb[0].mxu0
  %v483 = vadd.f32 %v290, %v482
  %v484 = vpop.f32.mrb[0].mxu0
  %485 = vdwg.mxu0
  %502 = vrot.lane.b32.xlu0 %v408, 96
  %v503 = vpop.permute.xlu0 %502
  %504 = vrot.lane.b32.xlu0 %v413, 96
  %v505 = vpop.permute.xlu0 %504
  %506 = vrot.lane.b32.xlu0 %v418, 96
  %v507 = vpop.permute.xlu0 %506
  %508 = vrot.lane.b32.xlu0 %v423, 96
  %v509 = vpop.permute.xlu0 %508
  %510 = vrot.lane.b32.xlu0 %v428, 96
  %v511 = vpop.permute.xlu0 %510
  %512 = vrot.lane.b32.xlu0 %v433, 96
  %v513 = vpop.permute.xlu0 %512
  %514 = vrot.lane.b32.xlu0 %v438, 96
  %v515 = vpop.permute.xlu0 %514
  %516 = vrot.lane.b32.xlu0 %v443, 96
  %v517 = vpop.permute.xlu0 %516
  %518 = vrot.lane.b32.xlu0 %v448, 96
  %v519 = vpop.permute.xlu0 %518
  %520 = vrot.lane.b32.xlu0 %v453, 96
  %v521 = vpop.permute.xlu0 %520
  %522 = vrot.lane.b32.xlu0 %v458, 96
  %v523 = vpop.permute.xlu0 %522
  %524 = vrot.lane.b32.xlu0 %v463, 96
  %v525 = vpop.permute.xlu0 %524
  %526 = vrot.lane.b32.xlu0 %v468, 96
  %v527 = vpop.permute.xlu0 %526
  %528 = vrot.lane.b32.xlu0 %v473, 96
  %v529 = vpop.permute.xlu0 %528
  %530 = vrot.lane.b32.xlu0 %v478, 96
  %v531 = vpop.permute.xlu0 %530
  %532 = vrot.lane.b32.xlu0 %v483, 96
  %v533 = vpop.permute.xlu0 %532
  %v550 = vmul.f32 %v408, %v503
  %v551 = vmul.f32 %v413, %v505
  %v552 = vmul.f32 %v418, %v507
  %v553 = vmul.f32 %v423, %v509
  %v554 = vmul.f32 %v428, %v511
  %v555 = vmul.f32 %v433, %v513
  %v556 = vmul.f32 %v438, %v515
  %v557 = vmul.f32 %v443, %v517
  %v558 = vmul.f32 %v448, %v519
  %v559 = vmul.f32 %v453, %v521
  %v560 = vmul.f32 %v458, %v523
  %v561 = vmul.f32 %v463, %v525
  %v562 = vmul.f32 %v468, %v527
  %v563 = vmul.f32 %v473, %v529
  %v564 = vmul.f32 %v478, %v531
  %v565 = vmul.f32 %v483, %v533
  %v566 = vmax.f32 %v550, 0.0
  %v567 = vmax.f32 %v551, 0.0
  %v568 = vmax.f32 %v552, 0.0
  %v569 = vmax.f32 %v553, 0.0
  %v570 = vmax.f32 %v554, 0.0
  %v571 = vmax.f32 %v555, 0.0
  %v572 = vmax.f32 %v556, 0.0
  %v573 = vmax.f32 %v557, 0.0
  %v574 = vmax.f32 %v558, 0.0
  %v575 = vmax.f32 %v559, 0.0
  %v576 = vmax.f32 %v560, 0.0
  %v577 = vmax.f32 %v561, 0.0
  %v578 = vmax.f32 %v562, 0.0
  %v579 = vmax.f32 %v563, 0.0
  %v580 = vmax.f32 %v564, 0.0
  %v581 = vmax.f32 %v565, 0.0
  %s582 = smul.u32 8, 8
  %s583 = smul.u32 %s582, 4
  %s584 = smul.u32 %s583, 2
  %s585 = sshll.u32 %s584, 4
  %586 = dma.done [#allocation3], %s585
  %v587 = vld [vmem:[%s9] sm:$0xff]
  %v588 = vld [vmem:[%s9 + $0x8] sm:$0xff]
  %v589 = vld [vmem:[#allocation2] sm:$0xff]
  %v590 = vld [vmem:[#allocation2 + $0x8] sm:$0xff]
  %v591 = vld [vmem:[#allocation2 + $0x10] sm:$0xff]
  %v592 = vld [vmem:[#allocation2 + $0x18] sm:$0xff]
  %v593 = vld [vmem:[#allocation2 + $0x20] sm:$0xff]
  %v594 = vld [vmem:[#allocation2 + $0x28] sm:$0xff]
  %v595 = vld [vmem:[#allocation2 + $0x30] sm:$0xff]
  %v596 = vld [vmem:[#allocation2 + $0x38] sm:$0xff]
  %s597 = scalar_lea.vmem [#allocation2], 64
  %v598 = vld [vmem:[%s597] sm:$0xff]
  %v599 = vld [vmem:[%s597 + $0x8] sm:$0xff]
  %v600 = vld [vmem:[%s597 + $0x10] sm:$0xff]
  %v601 = vld [vmem:[%s597 + $0x18] sm:$0xff]
  %v602 = vld [vmem:[%s597 + $0x20] sm:$0xff]
  %v603 = vld [vmem:[%s597 + $0x28] sm:$0xff]
  %v604 = vld [vmem:[%s597 + $0x30] sm:$0xff]
  %v605 = vld [vmem:[%s597 + $0x38] sm:$0xff]
  %vm606 = vcmask 261120
  %v608 = vsel %vm606, %v567, 0
  %610 = vmatprep.subr.mxu0 %v599
  %611 = vmatpush1.msra.mxu0 %v598
  %612 = vmatprep.subr.mxu0 %v601
  %613 = vmatpush1.msra.mxu0 %v600
  %614 = vmatprep.subr.mxu0 %v603
  %615 = vmatpush1.msra.mxu0 %v602
  %616 = vmatprep.subr.mxu0 %v605
  %617 = vmatpush1.msra.mxu0 %v604
  %618 = vmatprep.subr.mxu0 0.0
  %619 = vmatpush1.msra.mxu0 0.0
  %620 = vmatprep.subr.mxu0 0.0
  %621 = vmatpush1.msra.mxu0 0.0
  %622 = vmatprep.subr.mxu0 0.0
  %623 = vmatpush1.msra.mxu0 0.0
  %624 = vmatprep.subr.mxu0 0.0
  %625 = vmatpush1.msra.mxu0 0.0
  %626 = vmatprep.subr.mxu0 0.0
  %627 = vmatpush1.msra.mxu0 0.0
  %628 = vmatprep.subr.mxu0 0.0
  %629 = vmatpush1.msra.mxu0 0.0
  %630 = vmatprep.subr.mxu0 0.0
  %631 = vmatpush1.msra.mxu0 0.0
  %632 = vmatprep.subr.mxu0 0.0
  %633 = vmatpush1.msra.mxu0 0.0
  %634 = vmatprep.subr.mxu0 0.0
  %635 = vmatpush1.msra.mxu0 0.0
  %636 = vmatprep.subr.mxu0 0.0
  %637 = vmatpush1.msra.mxu0 0.0
  %638 = vmatprep.subr.mxu0 0.0
  %639 = vmatpush1.msra.mxu0 0.0
  %640 = vmatprep.subr.mxu0 0.0
  %641 = vmatpush1.msra.mxu0 0.0
  %642 = vmatprep.subr.mxu0 0.0
  %643 = vmatpush1.msra.mxu0 0.0
  %644 = vmatprep.subr.mxu0 0.0
  %645 = vmatpush1.msra.mxu0 0.0
  %646 = vmatprep.subr.mxu0 0.0
  %647 = vmatpush1.msra.mxu0 0.0
  %648 = vmatprep.subr.mxu0 0.0
  %649 = vmatpush1.msra.mxu0 0.0
  %650 = vmatprep.subr.mxu0 0.0
  %651 = vmatpush1.msra.mxu0 0.0
  %652 = vmatprep.subr.mxu0 0.0
  %653 = vmatpush1.msra.mxu0 0.0
  %654 = vmatprep.subr.mxu0 0.0
  %655 = vmatpush1.msra.mxu0 0.0
  %656 = vmatprep.subr.mxu0 0.0
  %657 = vmatpush1.msra.mxu0 0.0
  %658 = vmatprep.subr.mxu0 0.0
  %659 = vmatpush1.msra.mxu0 0.0
  %660 = vmatprep.subr.mxu0 0.0
  %661 = vmatpush1.msra.mxu0 0.0
  %662 = vmatprep.subr.mxu0 0.0
  %663 = vmatpush1.msra.mxu0 0.0
  %664 = vmatprep.subr.mxu0 0.0
  %665 = vmatpush1.msra.mxu0 0.0
  %666 = vmatprep.subr.mxu0 0.0
  %667 = vmatpush1.msra.mxu0 0.0
  %668 = vmatprep.subr.mxu0 0.0
  %669 = vmatpush1.msra.mxu0 0.0
  %670 = vmatprep.subr.mxu0 0.0
  %671 = vmatpush1.msra.mxu0 0.0
  %672 = vmatprep.subr.mxu0 0.0
  %673 = vmatpush1.msra.mxu0 0.0
  %674 = vmatprep.mubr.f32.mxu0 0.0
  %675 = vmatmul.mubr.f32.gmra.mrb[0].mxu0 %v608
  %v676 = vpop.f32.mrb[0].mxu0
  %v677 = vadd.f32 0.0, %v676
  %v678 = vpop.f32.mrb[0].mxu0
  %v679 = vadd.f32 0.0, %v678
  %680 = vdwg.mxu0
  %v682 = vsel %vm606, %v566, 0
  %684 = vmatprep.subr.mxu0 %v590
  %685 = vmatpush1.msra.mxu0 %v589
  %686 = vmatprep.subr.mxu0 %v592
  %687 = vmatpush1.msra.mxu0 %v591
  %688 = vmatprep.subr.mxu0 %v594
  %689 = vmatpush1.msra.mxu0 %v593
  %690 = vmatprep.subr.mxu0 %v596
  %691 = vmatpush1.msra.mxu0 %v595
  %692 = vmatprep.subr.mxu0 0.0
  %693 = vmatpush1.msra.mxu0 0.0
  %694 = vmatprep.subr.mxu0 0.0
  %695 = vmatpush1.msra.mxu0 0.0
  %696 = vmatprep.subr.mxu0 0.0
  %697 = vmatpush1.msra.mxu0 0.0
  %698 = vmatprep.subr.mxu0 0.0
  %699 = vmatpush1.msra.mxu0 0.0
  %700 = vmatprep.subr.mxu0 0.0
  %701 = vmatpush1.msra.mxu0 0.0
  %702 = vmatprep.subr.mxu0 0.0
  %703 = vmatpush1.msra.mxu0 0.0
  %704 = vmatprep.subr.mxu0 0.0
  %705 = vmatpush1.msra.mxu0 0.0
  %706 = vmatprep.subr.mxu0 0.0
  %707 = vmatpush1.msra.mxu0 0.0
  %708 = vmatprep.subr.mxu0 0.0
  %709 = vmatpush1.msra.mxu0 0.0
  %710 = vmatprep.subr.mxu0 0.0
  %711 = vmatpush1.msra.mxu0 0.0
  %712 = vmatprep.subr.mxu0 0.0
  %713 = vmatpush1.msra.mxu0 0.0
  %714 = vmatprep.subr.mxu0 0.0
  %715 = vmatpush1.msra.mxu0 0.0
  %716 = vmatprep.subr.mxu0 0.0
  %717 = vmatpush1.msra.mxu0 0.0
  %718 = vmatprep.subr.mxu0 0.0
  %719 = vmatpush1.msra.mxu0 0.0
  %720 = vmatprep.subr.mxu0 0.0
  %721 = vmatpush1.msra.mxu0 0.0
  %722 = vmatprep.subr.mxu0 0.0
  %723 = vmatpush1.msra.mxu0 0.0
  %724 = vmatprep.subr.mxu0 0.0
  %725 = vmatpush1.msra.mxu0 0.0
  %726 = vmatprep.subr.mxu0 0.0
  %727 = vmatpush1.msra.mxu0 0.0
  %728 = vmatprep.subr.mxu0 0.0
  %729 = vmatpush1.msra.mxu0 0.0
  %730 = vmatprep.subr.mxu0 0.0
  %731 = vmatpush1.msra.mxu0 0.0
  %732 = vmatprep.subr.mxu0 0.0
  %733 = vmatpush1.msra.mxu0 0.0
  %734 = vmatprep.subr.mxu0 0.0
  %735 = vmatpush1.msra.mxu0 0.0
  %736 = vmatprep.subr.mxu0 0.0
  %737 = vmatpush1.msra.mxu0 0.0
  %738 = vmatprep.subr.mxu0 0.0
  %739 = vmatpush1.msra.mxu0 0.0
  %740 = vmatprep.subr.mxu0 0.0
  %741 = vmatpush1.msra.mxu0 0.0
  %742 = vmatprep.subr.mxu0 0.0
  %743 = vmatpush1.msra.mxu0 0.0
  %744 = vmatprep.subr.mxu0 0.0
  %745 = vmatpush1.msra.mxu0 0.0
  %746 = vmatprep.subr.mxu0 0.0
  %747 = vmatpush1.msra.mxu0 0.0
  %748 = vmatprep.mubr.f32.mxu0 0.0
  %749 = vmatmul.mubr.f32.gmra.mrb[0].mxu0 %v682
  %v750 = vpop.f32.mrb[0].mxu0
  %v751 = vadd.f32 %v677, %v750
  %v752 = vpop.f32.mrb[0].mxu0
  %v753 = vadd.f32 %v679, %v752
  %754 = vdwg.mxu0
  %s755 = scalar_lea.vmem [#allocation2], 128
  %v756 = vld [vmem:[%s755] sm:$0xff]
  %v757 = vld [vmem:[%s755 + $0x8] sm:$0xff]
  %v758 = vld [vmem:[%s755 + $0x10] sm:$0xff]
  %v759 = vld [vmem:[%s755 + $0x18] sm:$0xff]
  %v760 = vld [vmem:[%s755 + $0x20] sm:$0xff]
  %v761 = vld [vmem:[%s755 + $0x28] sm:$0xff]
  %v762 = vld [vmem:[%s755 + $0x30] sm:$0xff]
  %v763 = vld [vmem:[%s755 + $0x38] sm:$0xff]
  %v765 = vsel %vm606, %v568, 0
  %767 = vmatprep.subr.mxu0 %v757
  %768 = vmatpush1.msra.mxu0 %v756
  %769 = vmatprep.subr.mxu0 %v759
  %770 = vmatpush1.msra.mxu0 %v758
  %771 = vmatprep.subr.mxu0 %v761
  %772 = vmatpush1.msra.mxu0 %v760
  %773 = vmatprep.subr.mxu0 %v763
  %774 = vmatpush1.msra.mxu0 %v762
  %775 = vmatprep.subr.mxu0 0.0
  %776 = vmatpush1.msra.mxu0 0.0
  %777 = vmatprep.subr.mxu0 0.0
  %778 = vmatpush1.msra.mxu0 0.0
  %779 = vmatprep.subr.mxu0 0.0
  %780 = vmatpush1.msra.mxu0 0.0
  %781 = vmatprep.subr.mxu0 0.0
  %782 = vmatpush1.msra.mxu0 0.0
  %783 = vmatprep.subr.mxu0 0.0
  %784 = vmatpush1.msra.mxu0 0.0
  %785 = vmatprep.subr.mxu0 0.0
  %786 = vmatpush1.msra.mxu0 0.0
  %787 = vmatprep.subr.mxu0 0.0
  %788 = vmatpush1.msra.mxu0 0.0
  %789 = vmatprep.subr.mxu0 0.0
  %790 = vmatpush1.msra.mxu0 0.0
  %791 = vmatprep.subr.mxu0 0.0
  %792 = vmatpush1.msra.mxu0 0.0
  %793 = vmatprep.subr.mxu0 0.0
  %794 = vmatpush1.msra.mxu0 0.0
  %795 = vmatprep.subr.mxu0 0.0
  %796 = vmatpush1.msra.mxu0 0.0
  %797 = vmatprep.subr.mxu0 0.0
  %798 = vmatpush1.msra.mxu0 0.0
  %799 = vmatprep.subr.mxu0 0.0
  %800 = vmatpush1.msra.mxu0 0.0
  %801 = vmatprep.subr.mxu0 0.0
  %802 = vmatpush1.msra.mxu0 0.0
  %803 = vmatprep.subr.mxu0 0.0
  %804 = vmatpush1.msra.mxu0 0.0
  %805 = vmatprep.subr.mxu0 0.0
  %806 = vmatpush1.msra.mxu0 0.0
  %807 = vmatprep.subr.mxu0 0.0
  %808 = vmatpush1.msra.mxu0 0.0
  %809 = vmatprep.subr.mxu0 0.0
  %810 = vmatpush1.msra.mxu0 0.0
  %811 = vmatprep.subr.mxu0 0.0
  %812 = vmatpush1.msra.mxu0 0.0
  %813 = vmatprep.subr.mxu0 0.0
  %814 = vmatpush1.msra.mxu0 0.0
  %815 = vmatprep.subr.mxu0 0.0
  %816 = vmatpush1.msra.mxu0 0.0
  %817 = vmatprep.subr.mxu0 0.0
  %818 = vmatpush1.msra.mxu0 0.0
  %819 = vmatprep.subr.mxu0 0.0
  %820 = vmatpush1.msra.mxu0 0.0
  %821 = vmatprep.subr.mxu0 0.0
  %822 = vmatpush1.msra.mxu0 0.0
  %823 = vmatprep.subr.mxu0 0.0
  %824 = vmatpush1.msra.mxu0 0.0
  %825 = vmatprep.subr.mxu0 0.0
  %826 = vmatpush1.msra.mxu0 0.0
  %827 = vmatprep.subr.mxu0 0.0
  %828 = vmatpush1.msra.mxu0 0.0
  %829 = vmatprep.subr.mxu0 0.0
  %830 = vmatpush1.msra.mxu0 0.0
  %831 = vmatprep.mubr.f32.mxu0 0.0
  %832 = vmatmul.mubr.f32.gmra.mrb[0].mxu0 %v765
  %v833 = vpop.f32.mrb[0].mxu0
  %v834 = vadd.f32 0.0, %v833
  %v835 = vpop.f32.mrb[0].mxu0
  %v836 = vadd.f32 0.0, %v835
  %837 = vdwg.mxu0
  %v838 = vadd.f32 %v751, %v834
  %v839 = vadd.f32 %v753, %v836
  %s840 = scalar_lea.vmem [#allocation2], 192
  %v841 = vld [vmem:[%s840] sm:$0xff]
  %v842 = vld [vmem:[%s840 + $0x8] sm:$0xff]
  %v843 = vld [vmem:[%s840 + $0x10] sm:$0xff]
  %v844 = vld [vmem:[%s840 + $0x18] sm:$0xff]
  %v845 = vld [vmem:[%s840 + $0x20] sm:$0xff]
  %v846 = vld [vmem:[%s840 + $0x28] sm:$0xff]
  %v847 = vld [vmem:[%s840 + $0x30] sm:$0xff]
  %v848 = vld [vmem:[%s840 + $0x38] sm:$0xff]
  %v850 = vsel %vm606, %v569, 0
  %852 = vmatprep.subr.mxu0 %v842
  %853 = vmatpush1.msra.mxu0 %v841
  %854 = vmatprep.subr.mxu0 %v844
  %855 = vmatpush1.msra.mxu0 %v843
  %856 = vmatprep.subr.mxu0 %v846
  %857 = vmatpush1.msra.mxu0 %v845
  %858 = vmatprep.subr.mxu0 %v848
  %859 = vmatpush1.msra.mxu0 %v847
  %860 = vmatprep.subr.mxu0 0.0
  %861 = vmatpush1.msra.mxu0 0.0
  %862 = vmatprep.subr.mxu0 0.0
  %863 = vmatpush1.msra.mxu0 0.0
  %864 = vmatprep.subr.mxu0 0.0
  %865 = vmatpush1.msra.mxu0 0.0
  %866 = vmatprep.subr.mxu0 0.0
  %867 = vmatpush1.msra.mxu0 0.0
  %868 = vmatprep.subr.mxu0 0.0
  %869 = vmatpush1.msra.mxu0 0.0
  %870 = vmatprep.subr.mxu0 0.0
  %871 = vmatpush1.msra.mxu0 0.0
  %872 = vmatprep.subr.mxu0 0.0
  %873 = vmatpush1.msra.mxu0 0.0
  %874 = vmatprep.subr.mxu0 0.0
  %875 = vmatpush1.msra.mxu0 0.0
  %876 = vmatprep.subr.mxu0 0.0
  %877 = vmatpush1.msra.mxu0 0.0
  %878 = vmatprep.subr.mxu0 0.0
  %879 = vmatpush1.msra.mxu0 0.0
  %880 = vmatprep.subr.mxu0 0.0
  %881 = vmatpush1.msra.mxu0 0.0
  %882 = vmatprep.subr.mxu0 0.0
  %883 = vmatpush1.msra.mxu0 0.0
  %884 = vmatprep.subr.mxu0 0.0
  %885 = vmatpush1.msra.mxu0 0.0
  %886 = vmatprep.subr.mxu0 0.0
  %887 = vmatpush1.msra.mxu0 0.0
  %888 = vmatprep.subr.mxu0 0.0
  %889 = vmatpush1.msra.mxu0 0.0
  %890 = vmatprep.subr.mxu0 0.0
  %891 = vmatpush1.msra.mxu0 0.0
  %892 = vmatprep.subr.mxu0 0.0
  %893 = vmatpush1.msra.mxu0 0.0
  %894 = vmatprep.subr.mxu0 0.0
  %895 = vmatpush1.msra.mxu0 0.0
  %896 = vmatprep.subr.mxu0 0.0
  %897 = vmatpush1.msra.mxu0 0.0
  %898 = vmatprep.subr.mxu0 0.0
  %899 = vmatpush1.msra.mxu0 0.0
  %900 = vmatprep.subr.mxu0 0.0
  %901 = vmatpush1.msra.mxu0 0.0
  %902 = vmatprep.subr.mxu0 0.0
  %903 = vmatpush1.msra.mxu0 0.0
  %904 = vmatprep.subr.mxu0 0.0
  %905 = vmatpush1.msra.mxu0 0.0
  %906 = vmatprep.subr.mxu0 0.0
  %907 = vmatpush1.msra.mxu0 0.0
  %908 = vmatprep.subr.mxu0 0.0
  %909 = vmatpush1.msra.mxu0 0.0
  %910 = vmatprep.subr.mxu0 0.0
  %911 = vmatpush1.msra.mxu0 0.0
  %912 = vmatprep.subr.mxu0 0.0
  %913 = vmatpush1.msra.mxu0 0.0
  %914 = vmatprep.subr.mxu0 0.0
  %915 = vmatpush1.msra.mxu0 0.0
  %916 = vmatprep.mubr.f32.mxu0 0.0
  %917 = vmatmul.mubr.f32.gmra.mrb[0].mxu0 %v850
  %v918 = vpop.f32.mrb[0].mxu0
  %v919 = vadd.f32 0.0, %v918
  %v920 = vpop.f32.mrb[0].mxu0
  %v921 = vadd.f32 0.0, %v920
  %922 = vdwg.mxu0
  %v923 = vadd.f32 %v838, %v919
  %v924 = vadd.f32 %v839, %v921
  %s925 = scalar_lea.vmem [#allocation2], 256
  %v926 = vld [vmem:[%s925] sm:$0xff]
  %v927 = vld [vmem:[%s925 + $0x8] sm:$0xff]
  %v928 = vld [vmem:[%s925 + $0x10] sm:$0xff]
  %v929 = vld [vmem:[%s925 + $0x18] sm:$0xff]
  %v930 = vld [vmem:[%s925 + $0x20] sm:$0xff]
  %v931 = vld [vmem:[%s925 + $0x28] sm:$0xff]
  %v932 = vld [vmem:[%s925 + $0x30] sm:$0xff]
  %v933 = vld [vmem:[%s925 + $0x38] sm:$0xff]
  %v935 = vsel %vm606, %v570, 0
  %937 = vmatprep.subr.mxu0 %v927
  %938 = vmatpush1.msra.mxu0 %v926
  %939 = vmatprep.subr.mxu0 %v929
  %940 = vmatpush1.msra.mxu0 %v928
  %941 = vmatprep.subr.mxu0 %v931
  %942 = vmatpush1.msra.mxu0 %v930
  %943 = vmatprep.subr.mxu0 %v933
  %944 = vmatpush1.msra.mxu0 %v932
  %945 = vmatprep.subr.mxu0 0.0
  %946 = vmatpush1.msra.mxu0 0.0
  %947 = vmatprep.subr.mxu0 0.0
  %948 = vmatpush1.msra.mxu0 0.0
  %949 = vmatprep.subr.mxu0 0.0
  %950 = vmatpush1.msra.mxu0 0.0
  %951 = vmatprep.subr.mxu0 0.0
  %952 = vmatpush1.msra.mxu0 0.0
  %953 = vmatprep.subr.mxu0 0.0
  %954 = vmatpush1.msra.mxu0 0.0
  %955 = vmatprep.subr.mxu0 0.0
  %956 = vmatpush1.msra.mxu0 0.0
  %957 = vmatprep.subr.mxu0 0.0
  %958 = vmatpush1.msra.mxu0 0.0
  %959 = vmatprep.subr.mxu0 0.0
  %960 = vmatpush1.msra.mxu0 0.0
  %961 = vmatprep.subr.mxu0 0.0
  %962 = vmatpush1.msra.mxu0 0.0
  %963 = vmatprep.subr.mxu0 0.0
  %964 = vmatpush1.msra.mxu0 0.0
  %965 = vmatprep.subr.mxu0 0.0
  %966 = vmatpush1.msra.mxu0 0.0
  %967 = vmatprep.subr.mxu0 0.0
  %968 = vmatpush1.msra.mxu0 0.0
  %969 = vmatprep.subr.mxu0 0.0
  %970 = vmatpush1.msra.mxu0 0.0
  %971 = vmatprep.subr.mxu0 0.0
  %972 = vmatpush1.msra.mxu0 0.0
  %973 = vmatprep.subr.mxu0 0.0
  %974 = vmatpush1.msra.mxu0 0.0
  %975 = vmatprep.subr.mxu0 0.0
  %976 = vmatpush1.msra.mxu0 0.0
  %977 = vmatprep.subr.mxu0 0.0
  %978 = vmatpush1.msra.mxu0 0.0
  %979 = vmatprep.subr.mxu0 0.0
  %980 = vmatpush1.msra.mxu0 0.0
  %981 = vmatprep.subr.mxu0 0.0
  %982 = vmatpush1.msra.mxu0 0.0
  %983 = vmatprep.subr.mxu0 0.0
  %984 = vmatpush1.msra.mxu0 0.0
  %985 = vmatprep.subr.mxu0 0.0
  %986 = vmatpush1.msra.mxu0 0.0
  %987 = vmatprep.subr.mxu0 0.0
  %988 = vmatpush1.msra.mxu0 0.0
  %989 = vmatprep.subr.mxu0 0.0
  %990 = vmatpush1.msra.mxu0 0.0
  %991 = vmatprep.subr.mxu0 0.0
  %992 = vmatpush1.msra.mxu0 0.0
  %993 = vmatprep.subr.mxu0 0.0
  %994 = vmatpush1.msra.mxu0 0.0
  %995 = vmatprep.subr.mxu0 0.0
  %996 = vmatpush1.msra.mxu0 0.0
  %997 = vmatprep.subr.mxu0 0.0
  %998 = vmatpush1.msra.mxu0 0.0
  %999 = vmatprep.subr.mxu0 0.0
  %1000 = vmatpush1.msra.mxu0 0.0
  %1001 = vmatprep.mubr.f32.mxu0 0.0
  %1002 = vmatmul.mubr.f32.gmra.mrb[0].mxu0 %v935
  %v1003 = vpop.f32.mrb[0].mxu0
  %v1004 = vadd.f32 0.0, %v1003
  %v1005 = vpop.f32.mrb[0].mxu0
  %v1006 = vadd.f32 0.0, %v1005
  %1007 = vdwg.mxu0
  %v1008 = vadd.f32 %v923, %v1004
  %v1009 = vadd.f32 %v924, %v1006
  %s1010 = scalar_lea.vmem [#allocation2], 320
  %v1011 = vld [vmem:[%s1010] sm:$0xff]
  %v1012 = vld [vmem:[%s1010 + $0x8] sm:$0xff]
  %v1013 = vld [vmem:[%s1010 + $0x10] sm:$0xff]
  %v1014 = vld [vmem:[%s1010 + $0x18] sm:$0xff]
  %v1015 = vld [vmem:[%s1010 + $0x20] sm:$0xff]
  %v1016 = vld [vmem:[%s1010 + $0x28] sm:$0xff]
  %v1017 = vld [vmem:[%s1010 + $0x30] sm:$0xff]
  %v1018 = vld [vmem:[%s1010 + $0x38] sm:$0xff]
  %v1020 = vsel %vm606, %v571, 0
  %1022 = vmatprep.subr.mxu0 %v1012
  %1023 = vmatpush1.msra.mxu0 %v1011
  %1024 = vmatprep.subr.mxu0 %v1014
  %1025 = vmatpush1.msra.mxu0 %v1013
  %1026 = vmatprep.subr.mxu0 %v1016
  %1027 = vmatpush1.msra.mxu0 %v1015
  %1028 = vmatprep.subr.mxu0 %v1018
  %1029 = vmatpush1.msra.mxu0 %v1017
  %1030 = vmatprep.subr.mxu0 0.0
  %1031 = vmatpush1.msra.mxu0 0.0
  %1032 = vmatprep.subr.mxu0 0.0
  %1033 = vmatpush1.msra.mxu0 0.0
  %1034 = vmatprep.subr.mxu0 0.0
  %1035 = vmatpush1.msra.mxu0 0.0
  %1036 = vmatprep.subr.mxu0 0.0
  %1037 = vmatpush1.msra.mxu0 0.0
  %1038 = vmatprep.subr.mxu0 0.0
  %1039 = vmatpush1.msra.mxu0 0.0
  %1040 = vmatprep.subr.mxu0 0.0
  %1041 = vmatpush1.msra.mxu0 0.0
  %1042 = vmatprep.subr.mxu0 0.0
  %1043 = vmatpush1.msra.mxu0 0.0
  %1044 = vmatprep.subr.mxu0 0.0
  %1045 = vmatpush1.msra.mxu0 0.0
  %1046 = vmatprep.subr.mxu0 0.0
  %1047 = vmatpush1.msra.mxu0 0.0
  %1048 = vmatprep.subr.mxu0 0.0
  %1049 = vmatpush1.msra.mxu0 0.0
  %1050 = vmatprep.subr.mxu0 0.0
  %1051 = vmatpush1.msra.mxu0 0.0
  %1052 = vmatprep.subr.mxu0 0.0
  %1053 = vmatpush1.msra.mxu0 0.0
  %1054 = vmatprep.subr.mxu0 0.0
  %1055 = vmatpush1.msra.mxu0 0.0
  %1056 = vmatprep.subr.mxu0 0.0
  %1057 = vmatpush1.msra.mxu0 0.0
  %1058 = vmatprep.subr.mxu0 0.0
  %1059 = vmatpush1.msra.mxu0 0.0
  %1060 = vmatprep.subr.mxu0 0.0
  %1061 = vmatpush1.msra.mxu0 0.0
  %1062 = vmatprep.subr.mxu0 0.0
  %1063 = vmatpush1.msra.mxu0 0.0
  %1064 = vmatprep.subr.mxu0 0.0
  %1065 = vmatpush1.msra.mxu0 0.0
  %1066 = vmatprep.subr.mxu0 0.0
  %1067 = vmatpush1.msra.mxu0 0.0
  %1068 = vmatprep.subr.mxu0 0.0
  %1069 = vmatpush1.msra.mxu0 0.0
  %1070 = vmatprep.subr.mxu0 0.0
  %1071 = vmatpush1.msra.mxu0 0.0
  %1072 = vmatprep.subr.mxu0 0.0
  %1073 = vmatpush1.msra.mxu0 0.0
  %1074 = vmatprep.subr.mxu0 0.0
  %1075 = vmatpush1.msra.mxu0 0.0
  %1076 = vmatprep.subr.mxu0 0.0
  %1077 = vmatpush1.msra.mxu0 0.0
  %1078 = vmatprep.subr.mxu0 0.0
  %1079 = vmatpush1.msra.mxu0 0.0
  %1080 = vmatprep.subr.mxu0 0.0
  %1081 = vmatpush1.msra.mxu0 0.0
  %1082 = vmatprep.subr.mxu0 0.0
  %1083 = vmatpush1.msra.mxu0 0.0
  %1084 = vmatprep.subr.mxu0 0.0
  %1085 = vmatpush1.msra.mxu0 0.0
  %1086 = vmatprep.mubr.f32.mxu0 0.0
  %1087 = vmatmul.mubr.f32.gmra.mrb[0].mxu0 %v1020
  %v1088 = vpop.f32.mrb[0].mxu0
  %v1089 = vadd.f32 0.0, %v1088
  %v1090 = vpop.f32.mrb[0].mxu0
  %v1091 = vadd.f32 0.0, %v1090
  %1092 = vdwg.mxu0
  %v1093 = vadd.f32 %v1008, %v1089
  %v1094 = vadd.f32 %v1009, %v1091
  %s1095 = scalar_lea.vmem [#allocation2], 384
  %v1096 = vld [vmem:[%s1095] sm:$0xff]
  %v1097 = vld [vmem:[%s1095 + $0x8] sm:$0xff]
  %v1098 = vld [vmem:[%s1095 + $0x10] sm:$0xff]
  %v1099 = vld [vmem:[%s1095 + $0x18] sm:$0xff]
  %v1100 = vld [vmem:[%s1095 + $0x20] sm:$0xff]
  %v1101 = vld [vmem:[%s1095 + $0x28] sm:$0xff]
  %v1102 = vld [vmem:[%s1095 + $0x30] sm:$0xff]
  %v1103 = vld [vmem:[%s1095 + $0x38] sm:$0xff]
  %v1105 = vsel %vm606, %v572, 0
  %1107 = vmatprep.subr.mxu0 %v1097
  %1108 = vmatpush1.msra.mxu0 %v1096
  %1109 = vmatprep.subr.mxu0 %v1099
  %1110 = vmatpush1.msra.mxu0 %v1098
  %1111 = vmatprep.subr.mxu0 %v1101
  %1112 = vmatpush1.msra.mxu0 %v1100
  %1113 = vmatprep.subr.mxu0 %v1103
  %1114 = vmatpush1.msra.mxu0 %v1102
  %1115 = vmatprep.subr.mxu0 0.0
  %1116 = vmatpush1.msra.mxu0 0.0
  %1117 = vmatprep.subr.mxu0 0.0
  %1118 = vmatpush1.msra.mxu0 0.0
  %1119 = vmatprep.subr.mxu0 0.0
  %1120 = vmatpush1.msra.mxu0 0.0
  %1121 = vmatprep.subr.mxu0 0.0
  %1122 = vmatpush1.msra.mxu0 0.0
  %1123 = vmatprep.subr.mxu0 0.0
  %1124 = vmatpush1.msra.mxu0 0.0
  %1125 = vmatprep.subr.mxu0 0.0
  %1126 = vmatpush1.msra.mxu0 0.0
  %1127 = vmatprep.subr.mxu0 0.0
  %1128 = vmatpush1.msra.mxu0 0.0
  %1129 = vmatprep.subr.mxu0 0.0
  %1130 = vmatpush1.msra.mxu0 0.0
  %1131 = vmatprep.subr.mxu0 0.0
  %1132 = vmatpush1.msra.mxu0 0.0
  %1133 = vmatprep.subr.mxu0 0.0
  %1134 = vmatpush1.msra.mxu0 0.0
  %1135 = vmatprep.subr.mxu0 0.0
  %1136 = vmatpush1.msra.mxu0 0.0
  %1137 = vmatprep.subr.mxu0 0.0
  %1138 = vmatpush1.msra.mxu0 0.0
  %1139 = vmatprep.subr.mxu0 0.0
  %1140 = vmatpush1.msra.mxu0 0.0
  %1141 = vmatprep.subr.mxu0 0.0
  %1142 = vmatpush1.msra.mxu0 0.0
  %1143 = vmatprep.subr.mxu0 0.0
  %1144 = vmatpush1.msra.mxu0 0.0
  %1145 = vmatprep.subr.mxu0 0.0
  %1146 = vmatpush1.msra.mxu0 0.0
  %1147 = vmatprep.subr.mxu0 0.0
  %1148 = vmatpush1.msra.mxu0 0.0
  %1149 = vmatprep.subr.mxu0 0.0
  %1150 = vmatpush1.msra.mxu0 0.0
  %1151 = vmatprep.subr.mxu0 0.0
  %1152 = vmatpush1.msra.mxu0 0.0
  %1153 = vmatprep.subr.mxu0 0.0
  %1154 = vmatpush1.msra.mxu0 0.0
  %1155 = vmatprep.subr.mxu0 0.0
  %1156 = vmatpush1.msra.mxu0 0.0
  %1157 = vmatprep.subr.mxu0 0.0
  %1158 = vmatpush1.msra.mxu0 0.0
  %1159 = vmatprep.subr.mxu0 0.0
  %1160 = vmatpush1.msra.mxu0 0.0
  %1161 = vmatprep.subr.mxu0 0.0
  %1162 = vmatpush1.msra.mxu0 0.0
  %1163 = vmatprep.subr.mxu0 0.0
  %1164 = vmatpush1.msra.mxu0 0.0
  %1165 = vmatprep.subr.mxu0 0.0
  %1166 = vmatpush1.msra.mxu0 0.0
  %1167 = vmatprep.subr.mxu0 0.0
  %1168 = vmatpush1.msra.mxu0 0.0
  %1169 = vmatprep.subr.mxu0 0.0
  %1170 = vmatpush1.msra.mxu0 0.0
  %1171 = vmatprep.mubr.f32.mxu0 0.0
  %1172 = vmatmul.mubr.f32.gmra.mrb[0].mxu0 %v1105
  %v1173 = vpop.f32.mrb[0].mxu0
  %v1174 = vadd.f32 0.0, %v1173
  %v1175 = vpop.f32.mrb[0].mxu0
  %v1176 = vadd.f32 0.0, %v1175
  %1177 = vdwg.mxu0
  %v1178 = vadd.f32 %v1093, %v1174
  %v1179 = vadd.f32 %v1094, %v1176
  %s1180 = scalar_lea.vmem [#allocation2], 448
  %v1181 = vld [vmem:[%s1180] sm:$0xff]
  %v1182 = vld [vmem:[%s1180 + $0x8] sm:$0xff]
  %v1183 = vld [vmem:[%s1180 + $0x10] sm:$0xff]
  %v1184 = vld [vmem:[%s1180 + $0x18] sm:$0xff]
  %v1185 = vld [vmem:[%s1180 + $0x20] sm:$0xff]
  %v1186 = vld [vmem:[%s1180 + $0x28] sm:$0xff]
  %v1187 = vld [vmem:[%s1180 + $0x30] sm:$0xff]
  %v1188 = vld [vmem:[%s1180 + $0x38] sm:$0xff]
  %v1190 = vsel %vm606, %v573, 0
  %1192 = vmatprep.subr.mxu0 %v1182
  %1193 = vmatpush1.msra.mxu0 %v1181
  %1194 = vmatprep.subr.mxu0 %v1184
  %1195 = vmatpush1.msra.mxu0 %v1183
  %1196 = vmatprep.subr.mxu0 %v1186
  %1197 = vmatpush1.msra.mxu0 %v1185
  %1198 = vmatprep.subr.mxu0 %v1188
  %1199 = vmatpush1.msra.mxu0 %v1187
  %1200 = vmatprep.subr.mxu0 0.0
  %1201 = vmatpush1.msra.mxu0 0.0
  %1202 = vmatprep.subr.mxu0 0.0
  %1203 = vmatpush1.msra.mxu0 0.0
  %1204 = vmatprep.subr.mxu0 0.0
  %1205 = vmatpush1.msra.mxu0 0.0
  %1206 = vmatprep.subr.mxu0 0.0
  %1207 = vmatpush1.msra.mxu0 0.0
  %1208 = vmatprep.subr.mxu0 0.0
  %1209 = vmatpush1.msra.mxu0 0.0
  %1210 = vmatprep.subr.mxu0 0.0
  %1211 = vmatpush1.msra.mxu0 0.0
  %1212 = vmatprep.subr.mxu0 0.0
  %1213 = vmatpush1.msra.mxu0 0.0
  %1214 = vmatprep.subr.mxu0 0.0
  %1215 = vmatpush1.msra.mxu0 0.0
  %1216 = vmatprep.subr.mxu0 0.0
  %1217 = vmatpush1.msra.mxu0 0.0
  %1218 = vmatprep.subr.mxu0 0.0
  %1219 = vmatpush1.msra.mxu0 0.0
  %1220 = vmatprep.subr.mxu0 0.0
  %1221 = vmatpush1.msra.mxu0 0.0
  %1222 = vmatprep.subr.mxu0 0.0
  %1223 = vmatpush1.msra.mxu0 0.0
  %1224 = vmatprep.subr.mxu0 0.0
  %1225 = vmatpush1.msra.mxu0 0.0
  %1226 = vmatprep.subr.mxu0 0.0
  %1227 = vmatpush1.msra.mxu0 0.0
  %1228 = vmatprep.subr.mxu0 0.0
  %1229 = vmatpush1.msra.mxu0 0.0
  %1230 = vmatprep.subr.mxu0 0.0
  %1231 = vmatpush1.msra.mxu0 0.0
  %1232 = vmatprep.subr.mxu0 0.0
  %1233 = vmatpush1.msra.mxu0 0.0
  %1234 = vmatprep.subr.mxu0 0.0
  %1235 = vmatpush1.msra.mxu0 0.0
  %1236 = vmatprep.subr.mxu0 0.0
  %1237 = vmatpush1.msra.mxu0 0.0
  %1238 = vmatprep.subr.mxu0 0.0
  %1239 = vmatpush1.msra.mxu0 0.0
  %1240 = vmatprep.subr.mxu0 0.0
  %1241 = vmatpush1.msra.mxu0 0.0
  %1242 = vmatprep.subr.mxu0 0.0
  %1243 = vmatpush1.msra.mxu0 0.0
  %1244 = vmatprep.subr.mxu0 0.0
  %1245 = vmatpush1.msra.mxu0 0.0
  %1246 = vmatprep.subr.mxu0 0.0
  %1247 = vmatpush1.msra.mxu0 0.0
  %1248 = vmatprep.subr.mxu0 0.0
  %1249 = vmatpush1.msra.mxu0 0.0
  %1250 = vmatprep.subr.mxu0 0.0
  %1251 = vmatpush1.msra.mxu0 0.0
  %1252 = vmatprep.subr.mxu0 0.0
  %1253 = vmatpush1.msra.mxu0 0.0
  %1254 = vmatprep.subr.mxu0 0.0
  %1255 = vmatpush1.msra.mxu0 0.0
  %1256 = vmatprep.mubr.f32.mxu0 0.0
  %1257 = vmatmul.mubr.f32.gmra.mrb[0].mxu0 %v1190
  %v1258 = vpop.f32.mrb[0].mxu0
  %v1259 = vadd.f32 0.0, %v1258
  %v1260 = vpop.f32.mrb[0].mxu0
  %v1261 = vadd.f32 0.0, %v1260
  %1262 = vdwg.mxu0
  %v1263 = vadd.f32 %v1178, %v1259
  %v1264 = vadd.f32 %v1179, %v1261
  %v1265 = vmul.f32 %v1263, %v587
  %v1266 = vmul.f32 %v1264, %v588
  %v1267 = vrot.slane %v1265, 4
  %v1268 = vadd.f32 %v1265, %v1267
  %v1269 = vrot.slane %v1268, 2
  %v1270 = vadd.f32 %v1268, %v1269
  %v1271 = vrot.slane %v1270, 1
  %v1272 = vadd.f32 %v1270, %v1271
  %v1273 = vrot.slane %v1266, 4
  %v1274 = vadd.f32 %v1266, %v1273
  %v1275 = vrot.slane %v1274, 2
  %v1276 = vadd.f32 %v1274, %v1275
  %v1277 = vrot.slane %v1276, 1
  %v1278 = vadd.f32 %v1276, %v1277
  %v1280 = vsel %vm606, %v575, 0
  %1282 = vmatprep.subr.mxu0 %v599
  %1283 = vmatpush1.msra.mxu0 %v598
  %1284 = vmatprep.subr.mxu0 %v601
  %1285 = vmatpush1.msra.mxu0 %v600
  %1286 = vmatprep.subr.mxu0 %v603
  %1287 = vmatpush1.msra.mxu0 %v602
  %1288 = vmatprep.subr.mxu0 %v605
  %1289 = vmatpush1.msra.mxu0 %v604
  %1290 = vmatprep.subr.mxu0 0.0
  %1291 = vmatpush1.msra.mxu0 0.0
  %1292 = vmatprep.subr.mxu0 0.0
  %1293 = vmatpush1.msra.mxu0 0.0
  %1294 = vmatprep.subr.mxu0 0.0
  %1295 = vmatpush1.msra.mxu0 0.0
  %1296 = vmatprep.subr.mxu0 0.0
  %1297 = vmatpush1.msra.mxu0 0.0
  %1298 = vmatprep.subr.mxu0 0.0
  %1299 = vmatpush1.msra.mxu0 0.0
  %1300 = vmatprep.subr.mxu0 0.0
  %1301 = vmatpush1.msra.mxu0 0.0
  %1302 = vmatprep.subr.mxu0 0.0
  %1303 = vmatpush1.msra.mxu0 0.0
  %1304 = vmatprep.subr.mxu0 0.0
  %1305 = vmatpush1.msra.mxu0 0.0
  %1306 = vmatprep.subr.mxu0 0.0
  %1307 = vmatpush1.msra.mxu0 0.0
  %1308 = vmatprep.subr.mxu0 0.0
  %1309 = vmatpush1.msra.mxu0 0.0
  %1310 = vmatprep.subr.mxu0 0.0
  %1311 = vmatpush1.msra.mxu0 0.0
  %1312 = vmatprep.subr.mxu0 0.0
  %1313 = vmatpush1.msra.mxu0 0.0
  %1314 = vmatprep.subr.mxu0 0.0
  %1315 = vmatpush1.msra.mxu0 0.0
  %1316 = vmatprep.subr.mxu0 0.0
  %1317 = vmatpush1.msra.mxu0 0.0
  %1318 = vmatprep.subr.mxu0 0.0
  %1319 = vmatpush1.msra.mxu0 0.0
  %1320 = vmatprep.subr.mxu0 0.0
  %1321 = vmatpush1.msra.mxu0 0.0
  %1322 = vmatprep.subr.mxu0 0.0
  %1323 = vmatpush1.msra.mxu0 0.0
  %1324 = vmatprep.subr.mxu0 0.0
  %1325 = vmatpush1.msra.mxu0 0.0
  %1326 = vmatprep.subr.mxu0 0.0
  %1327 = vmatpush1.msra.mxu0 0.0
  %1328 = vmatprep.subr.mxu0 0.0
  %1329 = vmatpush1.msra.mxu0 0.0
  %1330 = vmatprep.subr.mxu0 0.0
  %1331 = vmatpush1.msra.mxu0 0.0
  %1332 = vmatprep.subr.mxu0 0.0
  %1333 = vmatpush1.msra.mxu0 0.0
  %1334 = vmatprep.subr.mxu0 0.0
  %1335 = vmatpush1.msra.mxu0 0.0
  %1336 = vmatprep.subr.mxu0 0.0
  %1337 = vmatpush1.msra.mxu0 0.0
  %1338 = vmatprep.subr.mxu0 0.0
  %1339 = vmatpush1.msra.mxu0 0.0
  %1340 = vmatprep.subr.mxu0 0.0
  %1341 = vmatpush1.msra.mxu0 0.0
  %1342 = vmatprep.subr.mxu0 0.0
  %1343 = vmatpush1.msra.mxu0 0.0
  %1344 = vmatprep.subr.mxu0 0.0
  %1345 = vmatpush1.msra.mxu0 0.0
  %1346 = vmatprep.mubr.f32.mxu0 0.0
  %1347 = vmatmul.mubr.f32.gmra.mrb[0].mxu0 %v1280
  %v1348 = vpop.f32.mrb[0].mxu0
  %v1349 = vadd.f32 0.0, %v1348
  %v1350 = vpop.f32.mrb[0].mxu0
  %v1351 = vadd.f32 0.0, %v1350
  %1352 = vdwg.mxu0
  %v1354 = vsel %vm606, %v574, 0
  %1356 = vmatprep.subr.mxu0 %v590
  %1357 = vmatpush1.msra.mxu0 %v589
  %1358 = vmatprep.subr.mxu0 %v592
  %1359 = vmatpush1.msra.mxu0 %v591
  %1360 = vmatprep.subr.mxu0 %v594
  %1361 = vmatpush1.msra.mxu0 %v593
  %1362 = vmatprep.subr.mxu0 %v596
  %1363 = vmatpush1.msra.mxu0 %v595
  %1364 = vmatprep.subr.mxu0 0.0
  %1365 = vmatpush1.msra.mxu0 0.0
  %1366 = vmatprep.subr.mxu0 0.0
  %1367 = vmatpush1.msra.mxu0 0.0
  %1368 = vmatprep.subr.mxu0 0.0
  %1369 = vmatpush1.msra.mxu0 0.0
  %1370 = vmatprep.subr.mxu0 0.0
  %1371 = vmatpush1.msra.mxu0 0.0
  %1372 = vmatprep.subr.mxu0 0.0
  %1373 = vmatpush1.msra.mxu0 0.0
  %1374 = vmatprep.subr.mxu0 0.0
  %1375 = vmatpush1.msra.mxu0 0.0
  %1376 = vmatprep.subr.mxu0 0.0
  %1377 = vmatpush1.msra.mxu0 0.0
  %1378 = vmatprep.subr.mxu0 0.0
  %1379 = vmatpush1.msra.mxu0 0.0
  %1380 = vmatprep.subr.mxu0 0.0
  %1381 = vmatpush1.msra.mxu0 0.0
  %1382 = vmatprep.subr.mxu0 0.0
  %1383 = vmatpush1.msra.mxu0 0.0
  %1384 = vmatprep.subr.mxu0 0.0
  %1385 = vmatpush1.msra.mxu0 0.0
  %1386 = vmatprep.subr.mxu0 0.0
  %1387 = vmatpush1.msra.mxu0 0.0
  %1388 = vmatprep.subr.mxu0 0.0
  %1389 = vmatpush1.msra.mxu0 0.0
  %1390 = vmatprep.subr.mxu0 0.0
  %1391 = vmatpush1.msra.mxu0 0.0
  %1392 = vmatprep.subr.mxu0 0.0
  %1393 = vmatpush1.msra.mxu0 0.0
  %1394 = vmatprep.subr.mxu0 0.0
  %1395 = vmatpush1.msra.mxu0 0.0
  %1396 = vmatprep.subr.mxu0 0.0
  %1397 = vmatpush1.msra.mxu0 0.0
  %1398 = vmatprep.subr.mxu0 0.0
  %1399 = vmatpush1.msra.mxu0 0.0
  %1400 = vmatprep.subr.mxu0 0.0
  %1401 = vmatpush1.msra.mxu0 0.0
  %1402 = vmatprep.subr.mxu0 0.0
  %1403 = vmatpush1.msra.mxu0 0.0
  %1404 = vmatprep.subr.mxu0 0.0
  %1405 = vmatpush1.msra.mxu0 0.0
  %1406 = vmatprep.subr.mxu0 0.0
  %1407 = vmatpush1.msra.mxu0 0.0
  %1408 = vmatprep.subr.mxu0 0.0
  %1409 = vmatpush1.msra.mxu0 0.0
  %1410 = vmatprep.subr.mxu0 0.0
  %1411 = vmatpush1.msra.mxu0 0.0
  %1412 = vmatprep.subr.mxu0 0.0
  %1413 = vmatpush1.msra.mxu0 0.0
  %1414 = vmatprep.subr.mxu0 0.0
  %1415 = vmatpush1.msra.mxu0 0.0
  %1416 = vmatprep.subr.mxu0 0.0
  %1417 = vmatpush1.msra.mxu0 0.0
  %1418 = vmatprep.subr.mxu0 0.0
  %1419 = vmatpush1.msra.mxu0 0.0
  %1420 = vmatprep.mubr.f32.mxu0 0.0
  %1421 = vmatmul.mubr.f32.gmra.mrb[0].mxu0 %v1354
  %v1422 = vpop.f32.mrb[0].mxu0
  %v1423 = vadd.f32 %v1349, %v1422
  %v1424 = vpop.f32.mrb[0].mxu0
  %v1425 = vadd.f32 %v1351, %v1424
  %1426 = vdwg.mxu0
  %v1428 = vsel %vm606, %v576, 0
  %1430 = vmatprep.subr.mxu0 %v757
  %1431 = vmatpush1.msra.mxu0 %v756
  %1432 = vmatprep.subr.mxu0 %v759
  %1433 = vmatpush1.msra.mxu0 %v758
  %1434 = vmatprep.subr.mxu0 %v761
  %1435 = vmatpush1.msra.mxu0 %v760
  %1436 = vmatprep.subr.mxu0 %v763
  %1437 = vmatpush1.msra.mxu0 %v762
  %1438 = vmatprep.subr.mxu0 0.0
  %1439 = vmatpush1.msra.mxu0 0.0
  %1440 = vmatprep.subr.mxu0 0.0
  %1441 = vmatpush1.msra.mxu0 0.0
  %1442 = vmatprep.subr.mxu0 0.0
  %1443 = vmatpush1.msra.mxu0 0.0
  %1444 = vmatprep.subr.mxu0 0.0
  %1445 = vmatpush1.msra.mxu0 0.0
  %1446 = vmatprep.subr.mxu0 0.0
  %1447 = vmatpush1.msra.mxu0 0.0
  %1448 = vmatprep.subr.mxu0 0.0
  %1449 = vmatpush1.msra.mxu0 0.0
  %1450 = vmatprep.subr.mxu0 0.0
  %1451 = vmatpush1.msra.mxu0 0.0
  %1452 = vmatprep.subr.mxu0 0.0
  %1453 = vmatpush1.msra.mxu0 0.0
  %1454 = vmatprep.subr.mxu0 0.0
  %1455 = vmatpush1.msra.mxu0 0.0
  %1456 = vmatprep.subr.mxu0 0.0
  %1457 = vmatpush1.msra.mxu0 0.0
  %1458 = vmatprep.subr.mxu0 0.0
  %1459 = vmatpush1.msra.mxu0 0.0
  %1460 = vmatprep.subr.mxu0 0.0
  %1461 = vmatpush1.msra.mxu0 0.0
  %1462 = vmatprep.subr.mxu0 0.0
  %1463 = vmatpush1.msra.mxu0 0.0
  %1464 = vmatprep.subr.mxu0 0.0
  %1465 = vmatpush1.msra.mxu0 0.0
  %1466 = vmatprep.subr.mxu0 0.0
  %1467 = vmatpush1.msra.mxu0 0.0
  %1468 = vmatprep.subr.mxu0 0.0
  %1469 = vmatpush1.msra.mxu0 0.0
  %1470 = vmatprep.subr.mxu0 0.0
  %1471 = vmatpush1.msra.mxu0 0.0
  %1472 = vmatprep.subr.mxu0 0.0
  %1473 = vmatpush1.msra.mxu0 0.0
  %1474 = vmatprep.subr.mxu0 0.0
  %1475 = vmatpush1.msra.mxu0 0.0
  %1476 = vmatprep.subr.mxu0 0.0
  %1477 = vmatpush1.msra.mxu0 0.0
  %1478 = vmatprep.subr.mxu0 0.0
  %1479 = vmatpush1.msra.mxu0 0.0
  %1480 = vmatprep.subr.mxu0 0.0
  %1481 = vmatpush1.msra.mxu0 0.0
  %1482 = vmatprep.subr.mxu0 0.0
  %1483 = vmatpush1.msra.mxu0 0.0
  %1484 = vmatprep.subr.mxu0 0.0
  %1485 = vmatpush1.msra.mxu0 0.0
  %1486 = vmatprep.subr.mxu0 0.0
  %1487 = vmatpush1.msra.mxu0 0.0
  %1488 = vmatprep.subr.mxu0 0.0
  %1489 = vmatpush1.msra.mxu0 0.0
  %1490 = vmatprep.subr.mxu0 0.0
  %1491 = vmatpush1.msra.mxu0 0.0
  %1492 = vmatprep.subr.mxu0 0.0
  %1493 = vmatpush1.msra.mxu0 0.0
  %1494 = vmatprep.mubr.f32.mxu0 0.0
  %1495 = vmatmul.mubr.f32.gmra.mrb[0].mxu0 %v1428
  %v1496 = vpop.f32.mrb[0].mxu0
  %v1497 = vadd.f32 0.0, %v1496
  %v1498 = vpop.f32.mrb[0].mxu0
  %v1499 = vadd.f32 0.0, %v1498
  %1500 = vdwg.mxu0
  %v1501 = vadd.f32 %v1423, %v1497
  %v1502 = vadd.f32 %v1425, %v1499
  %v1504 = vsel %vm606, %v577, 0
  %1506 = vmatprep.subr.mxu0 %v842
  %1507 = vmatpush1.msra.mxu0 %v841
  %1508 = vmatprep.subr.mxu0 %v844
  %1509 = vmatpush1.msra.mxu0 %v843
  %1510 = vmatprep.subr.mxu0 %v846
  %1511 = vmatpush1.msra.mxu0 %v845
  %1512 = vmatprep.subr.mxu0 %v848
  %1513 = vmatpush1.msra.mxu0 %v847
  %1514 = vmatprep.subr.mxu0 0.0
  %1515 = vmatpush1.msra.mxu0 0.0
  %1516 = vmatprep.subr.mxu0 0.0
  %1517 = vmatpush1.msra.mxu0 0.0
  %1518 = vmatprep.subr.mxu0 0.0
  %1519 = vmatpush1.msra.mxu0 0.0
  %1520 = vmatprep.subr.mxu0 0.0
  %1521 = vmatpush1.msra.mxu0 0.0
  %1522 = vmatprep.subr.mxu0 0.0
  %1523 = vmatpush1.msra.mxu0 0.0
  %1524 = vmatprep.subr.mxu0 0.0
  %1525 = vmatpush1.msra.mxu0 0.0
  %1526 = vmatprep.subr.mxu0 0.0
  %1527 = vmatpush1.msra.mxu0 0.0
  %1528 = vmatprep.subr.mxu0 0.0
  %1529 = vmatpush1.msra.mxu0 0.0
  %1530 = vmatprep.subr.mxu0 0.0
  %1531 = vmatpush1.msra.mxu0 0.0
  %1532 = vmatprep.subr.mxu0 0.0
  %1533 = vmatpush1.msra.mxu0 0.0
  %1534 = vmatprep.subr.mxu0 0.0
  %1535 = vmatpush1.msra.mxu0 0.0
  %1536 = vmatprep.subr.mxu0 0.0
  %1537 = vmatpush1.msra.mxu0 0.0
  %1538 = vmatprep.subr.mxu0 0.0
  %1539 = vmatpush1.msra.mxu0 0.0
  %1540 = vmatprep.subr.mxu0 0.0
  %1541 = vmatpush1.msra.mxu0 0.0
  %1542 = vmatprep.subr.mxu0 0.0
  %1543 = vmatpush1.msra.mxu0 0.0
  %1544 = vmatprep.subr.mxu0 0.0
  %1545 = vmatpush1.msra.mxu0 0.0
  %1546 = vmatprep.subr.mxu0 0.0
  %1547 = vmatpush1.msra.mxu0 0.0
  %1548 = vmatprep.subr.mxu0 0.0
  %1549 = vmatpush1.msra.mxu0 0.0
  %1550 = vmatprep.subr.mxu0 0.0
  %1551 = vmatpush1.msra.mxu0 0.0
  %1552 = vmatprep.subr.mxu0 0.0
  %1553 = vmatpush1.msra.mxu0 0.0
  %1554 = vmatprep.subr.mxu0 0.0
  %1555 = vmatpush1.msra.mxu0 0.0
  %1556 = vmatprep.subr.mxu0 0.0
  %1557 = vmatpush1.msra.mxu0 0.0
  %1558 = vmatprep.subr.mxu0 0.0
  %1559 = vmatpush1.msra.mxu0 0.0
  %1560 = vmatprep.subr.mxu0 0.0
  %1561 = vmatpush1.msra.mxu0 0.0
  %1562 = vmatprep.subr.mxu0 0.0
  %1563 = vmatpush1.msra.mxu0 0.0
  %1564 = vmatprep.subr.mxu0 0.0
  %1565 = vmatpush1.msra.mxu0 0.0
  %1566 = vmatprep.subr.mxu0 0.0
  %1567 = vmatpush1.msra.mxu0 0.0
  %1568 = vmatprep.subr.mxu0 0.0
  %1569 = vmatpush1.msra.mxu0 0.0
  %1570 = vmatprep.mubr.f32.mxu0 0.0
  %1571 = vmatmul.mubr.f32.gmra.mrb[0].mxu0 %v1504
  %v1572 = vpop.f32.mrb[0].mxu0
  %v1573 = vadd.f32 0.0, %v1572
  %v1574 = vpop.f32.mrb[0].mxu0
  %v1575 = vadd.f32 0.0, %v1574
  %1576 = vdwg.mxu0
  %v1577 = vadd.f32 %v1501, %v1573
  %v1578 = vadd.f32 %v1502, %v1575
  %v1580 = vsel %vm606, %v578, 0
  %1582 = vmatprep.subr.mxu0 %v927
  %1583 = vmatpush1.msra.mxu0 %v926
  %1584 = vmatprep.subr.mxu0 %v929
  %1585 = vmatpush1.msra.mxu0 %v928
  %1586 = vmatprep.subr.mxu0 %v931
  %1587 = vmatpush1.msra.mxu0 %v930
  %1588 = vmatprep.subr.mxu0 %v933
  %1589 = vmatpush1.msra.mxu0 %v932
  %1590 = vmatprep.subr.mxu0 0.0
  %1591 = vmatpush1.msra.mxu0 0.0
  %1592 = vmatprep.subr.mxu0 0.0
  %1593 = vmatpush1.msra.mxu0 0.0
  %1594 = vmatprep.subr.mxu0 0.0
  %1595 = vmatpush1.msra.mxu0 0.0
  %1596 = vmatprep.subr.mxu0 0.0
  %1597 = vmatpush1.msra.mxu0 0.0
  %1598 = vmatprep.subr.mxu0 0.0
  %1599 = vmatpush1.msra.mxu0 0.0
  %1600 = vmatprep.subr.mxu0 0.0
  %1601 = vmatpush1.msra.mxu0 0.0
  %1602 = vmatprep.subr.mxu0 0.0
  %1603 = vmatpush1.msra.mxu0 0.0
  %1604 = vmatprep.subr.mxu0 0.0
  %1605 = vmatpush1.msra.mxu0 0.0
  %1606 = vmatprep.subr.mxu0 0.0
  %1607 = vmatpush1.msra.mxu0 0.0
  %1608 = vmatprep.subr.mxu0 0.0
  %1609 = vmatpush1.msra.mxu0 0.0
  %1610 = vmatprep.subr.mxu0 0.0
  %1611 = vmatpush1.msra.mxu0 0.0
  %1612 = vmatprep.subr.mxu0 0.0
  %1613 = vmatpush1.msra.mxu0 0.0
  %1614 = vmatprep.subr.mxu0 0.0
  %1615 = vmatpush1.msra.mxu0 0.0
  %1616 = vmatprep.subr.mxu0 0.0
  %1617 = vmatpush1.msra.mxu0 0.0
  %1618 = vmatprep.subr.mxu0 0.0
  %1619 = vmatpush1.msra.mxu0 0.0
  %1620 = vmatprep.subr.mxu0 0.0
  %1621 = vmatpush1.msra.mxu0 0.0
  %1622 = vmatprep.subr.mxu0 0.0
  %1623 = vmatpush1.msra.mxu0 0.0
  %1624 = vmatprep.subr.mxu0 0.0
  %1625 = vmatpush1.msra.mxu0 0.0
  %1626 = vmatprep.subr.mxu0 0.0
  %1627 = vmatpush1.msra.mxu0 0.0
  %1628 = vmatprep.subr.mxu0 0.0
  %1629 = vmatpush1.msra.mxu0 0.0
  %1630 = vmatprep.subr.mxu0 0.0
  %1631 = vmatpush1.msra.mxu0 0.0
  %1632 = vmatprep.subr.mxu0 0.0
  %1633 = vmatpush1.msra.mxu0 0.0
  %1634 = vmatprep.subr.mxu0 0.0
  %1635 = vmatpush1.msra.mxu0 0.0
  %1636 = vmatprep.subr.mxu0 0.0
  %1637 = vmatpush1.msra.mxu0 0.0
  %1638 = vmatprep.subr.mxu0 0.0
  %1639 = vmatpush1.msra.mxu0 0.0
  %1640 = vmatprep.subr.mxu0 0.0
  %1641 = vmatpush1.msra.mxu0 0.0
  %1642 = vmatprep.subr.mxu0 0.0
  %1643 = vmatpush1.msra.mxu0 0.0
  %1644 = vmatprep.subr.mxu0 0.0
  %1645 = vmatpush1.msra.mxu0 0.0
  %1646 = vmatprep.mubr.f32.mxu0 0.0
  %1647 = vmatmul.mubr.f32.gmra.mrb[0].mxu0 %v1580
  %v1648 = vpop.f32.mrb[0].mxu0
  %v1649 = vadd.f32 0.0, %v1648
  %v1650 = vpop.f32.mrb[0].mxu0
  %v1651 = vadd.f32 0.0, %v1650
  %1652 = vdwg.mxu0
  %v1653 = vadd.f32 %v1577, %v1649
  %v1654 = vadd.f32 %v1578, %v1651
  %v1656 = vsel %vm606, %v579, 0
  %1658 = vmatprep.subr.mxu0 %v1012
  %1659 = vmatpush1.msra.mxu0 %v1011
  %1660 = vmatprep.subr.mxu0 %v1014
  %1661 = vmatpush1.msra.mxu0 %v1013
  %1662 = vmatprep.subr.mxu0 %v1016
  %1663 = vmatpush1.msra.mxu0 %v1015
  %1664 = vmatprep.subr.mxu0 %v1018
  %1665 = vmatpush1.msra.mxu0 %v1017
  %1666 = vmatprep.subr.mxu0 0.0
  %1667 = vmatpush1.msra.mxu0 0.0
  %1668 = vmatprep.subr.mxu0 0.0
  %1669 = vmatpush1.msra.mxu0 0.0
  %1670 = vmatprep.subr.mxu0 0.0
  %1671 = vmatpush1.msra.mxu0 0.0
  %1672 = vmatprep.subr.mxu0 0.0
  %1673 = vmatpush1.msra.mxu0 0.0
  %1674 = vmatprep.subr.mxu0 0.0
  %1675 = vmatpush1.msra.mxu0 0.0
  %1676 = vmatprep.subr.mxu0 0.0
  %1677 = vmatpush1.msra.mxu0 0.0
  %1678 = vmatprep.subr.mxu0 0.0
  %1679 = vmatpush1.msra.mxu0 0.0
  %1680 = vmatprep.subr.mxu0 0.0
  %1681 = vmatpush1.msra.mxu0 0.0
  %1682 = vmatprep.subr.mxu0 0.0
  %1683 = vmatpush1.msra.mxu0 0.0
  %1684 = vmatprep.subr.mxu0 0.0
  %1685 = vmatpush1.msra.mxu0 0.0
  %1686 = vmatprep.subr.mxu0 0.0
  %1687 = vmatpush1.msra.mxu0 0.0
  %1688 = vmatprep.subr.mxu0 0.0
  %1689 = vmatpush1.msra.mxu0 0.0
  %1690 = vmatprep.subr.mxu0 0.0
  %1691 = vmatpush1.msra.mxu0 0.0
  %1692 = vmatprep.subr.mxu0 0.0
  %1693 = vmatpush1.msra.mxu0 0.0
  %1694 = vmatprep.subr.mxu0 0.0
  %1695 = vmatpush1.msra.mxu0 0.0
  %1696 = vmatprep.subr.mxu0 0.0
  %1697 = vmatpush1.msra.mxu0 0.0
  %1698 = vmatprep.subr.mxu0 0.0
  %1699 = vmatpush1.msra.mxu0 0.0
  %1700 = vmatprep.subr.mxu0 0.0
  %1701 = vmatpush1.msra.mxu0 0.0
  %1702 = vmatprep.subr.mxu0 0.0
  %1703 = vmatpush1.msra.mxu0 0.0
  %1704 = vmatprep.subr.mxu0 0.0
  %1705 = vmatpush1.msra.mxu0 0.0
  %1706 = vmatprep.subr.mxu0 0.0
  %1707 = vmatpush1.msra.mxu0 0.0
  %1708 = vmatprep.subr.mxu0 0.0
  %1709 = vmatpush1.msra.mxu0 0.0
  %1710 = vmatprep.subr.mxu0 0.0
  %1711 = vmatpush1.msra.mxu0 0.0
  %1712 = vmatprep.subr.mxu0 0.0
  %1713 = vmatpush1.msra.mxu0 0.0
  %1714 = vmatprep.subr.mxu0 0.0
  %1715 = vmatpush1.msra.mxu0 0.0
  %1716 = vmatprep.subr.mxu0 0.0
  %1717 = vmatpush1.msra.mxu0 0.0
  %1718 = vmatprep.subr.mxu0 0.0
  %1719 = vmatpush1.msra.mxu0 0.0
  %1720 = vmatprep.subr.mxu0 0.0
  %1721 = vmatpush1.msra.mxu0 0.0
  %1722 = vmatprep.mubr.f32.mxu0 0.0
  %1723 = vmatmul.mubr.f32.gmra.mrb[0].mxu0 %v1656
  %v1724 = vpop.f32.mrb[0].mxu0
  %v1725 = vadd.f32 0.0, %v1724
  %v1726 = vpop.f32.mrb[0].mxu0
  %v1727 = vadd.f32 0.0, %v1726
  %1728 = vdwg.mxu0
  %v1729 = vadd.f32 %v1653, %v1725
  %v1730 = vadd.f32 %v1654, %v1727
  %v1732 = vsel %vm606, %v580, 0
  %1734 = vmatprep.subr.mxu0 %v1097
  %1735 = vmatpush1.msra.mxu0 %v1096
  %1736 = vmatprep.subr.mxu0 %v1099
  %1737 = vmatpush1.msra.mxu0 %v1098
  %1738 = vmatprep.subr.mxu0 %v1101
  %1739 = vmatpush1.msra.mxu0 %v1100
  %1740 = vmatprep.subr.mxu0 %v1103
  %1741 = vmatpush1.msra.mxu0 %v1102
  %1742 = vmatprep.subr.mxu0 0.0
  %1743 = vmatpush1.msra.mxu0 0.0
  %1744 = vmatprep.subr.mxu0 0.0
  %1745 = vmatpush1.msra.mxu0 0.0
  %1746 = vmatprep.subr.mxu0 0.0
  %1747 = vmatpush1.msra.mxu0 0.0
  %1748 = vmatprep.subr.mxu0 0.0
  %1749 = vmatpush1.msra.mxu0 0.0
  %1750 = vmatprep.subr.mxu0 0.0
  %1751 = vmatpush1.msra.mxu0 0.0
  %1752 = vmatprep.subr.mxu0 0.0
  %1753 = vmatpush1.msra.mxu0 0.0
  %1754 = vmatprep.subr.mxu0 0.0
  %1755 = vmatpush1.msra.mxu0 0.0
  %1756 = vmatprep.subr.mxu0 0.0
  %1757 = vmatpush1.msra.mxu0 0.0
  %1758 = vmatprep.subr.mxu0 0.0
  %1759 = vmatpush1.msra.mxu0 0.0
  %1760 = vmatprep.subr.mxu0 0.0
  %1761 = vmatpush1.msra.mxu0 0.0
  %1762 = vmatprep.subr.mxu0 0.0
  %1763 = vmatpush1.msra.mxu0 0.0
  %1764 = vmatprep.subr.mxu0 0.0
  %1765 = vmatpush1.msra.mxu0 0.0
  %1766 = vmatprep.subr.mxu0 0.0
  %1767 = vmatpush1.msra.mxu0 0.0
  %1768 = vmatprep.subr.mxu0 0.0
  %1769 = vmatpush1.msra.mxu0 0.0
  %1770 = vmatprep.subr.mxu0 0.0
  %1771 = vmatpush1.msra.mxu0 0.0
  %1772 = vmatprep.subr.mxu0 0.0
  %1773 = vmatpush1.msra.mxu0 0.0
  %1774 = vmatprep.subr.mxu0 0.0
  %1775 = vmatpush1.msra.mxu0 0.0
  %1776 = vmatprep.subr.mxu0 0.0
  %1777 = vmatpush1.msra.mxu0 0.0
  %1778 = vmatprep.subr.mxu0 0.0
  %1779 = vmatpush1.msra.mxu0 0.0
  %1780 = vmatprep.subr.mxu0 0.0
  %1781 = vmatpush1.msra.mxu0 0.0
  %1782 = vmatprep.subr.mxu0 0.0
  %1783 = vmatpush1.msra.mxu0 0.0
  %1784 = vmatprep.subr.mxu0 0.0
  %1785 = vmatpush1.msra.mxu0 0.0
  %1786 = vmatprep.subr.mxu0 0.0
  %1787 = vmatpush1.msra.mxu0 0.0
  %1788 = vmatprep.subr.mxu0 0.0
  %1789 = vmatpush1.msra.mxu0 0.0
  %1790 = vmatprep.subr.mxu0 0.0
  %1791 = vmatpush1.msra.mxu0 0.0
  %1792 = vmatprep.subr.mxu0 0.0
  %1793 = vmatpush1.msra.mxu0 0.0
  %1794 = vmatprep.subr.mxu0 0.0
  %1795 = vmatpush1.msra.mxu0 0.0
  %1796 = vmatprep.subr.mxu0 0.0
  %1797 = vmatpush1.msra.mxu0 0.0
  %1798 = vmatprep.mubr.f32.mxu0 0.0
  %1799 = vmatmul.mubr.f32.gmra.mrb[0].mxu0 %v1732
  %v1800 = vpop.f32.mrb[0].mxu0
  %v1801 = vadd.f32 0.0, %v1800
  %v1802 = vpop.f32.mrb[0].mxu0
  %v1803 = vadd.f32 0.0, %v1802
  %1804 = vdwg.mxu0
  %v1805 = vadd.f32 %v1729, %v1801
  %v1806 = vadd.f32 %v1730, %v1803
  %v1808 = vsel %vm606, %v581, 0
  %1810 = vmatprep.subr.mxu0 %v1182
  %1811 = vmatpush1.msra.mxu0 %v1181
  %1812 = vmatprep.subr.mxu0 %v1184
  %1813 = vmatpush1.msra.mxu0 %v1183
  %1814 = vmatprep.subr.mxu0 %v1186
  %1815 = vmatpush1.msra.mxu0 %v1185
  %1816 = vmatprep.subr.mxu0 %v1188
  %1817 = vmatpush1.msra.mxu0 %v1187
  %1818 = vmatprep.subr.mxu0 0.0
  %1819 = vmatpush1.msra.mxu0 0.0
  %1820 = vmatprep.subr.mxu0 0.0
  %1821 = vmatpush1.msra.mxu0 0.0
  %1822 = vmatprep.subr.mxu0 0.0
  %1823 = vmatpush1.msra.mxu0 0.0
  %1824 = vmatprep.subr.mxu0 0.0
  %1825 = vmatpush1.msra.mxu0 0.0
  %1826 = vmatprep.subr.mxu0 0.0
  %1827 = vmatpush1.msra.mxu0 0.0
  %1828 = vmatprep.subr.mxu0 0.0
  %1829 = vmatpush1.msra.mxu0 0.0
  %1830 = vmatprep.subr.mxu0 0.0
  %1831 = vmatpush1.msra.mxu0 0.0
  %1832 = vmatprep.subr.mxu0 0.0
  %1833 = vmatpush1.msra.mxu0 0.0
  %1834 = vmatprep.subr.mxu0 0.0
  %1835 = vmatpush1.msra.mxu0 0.0
  %1836 = vmatprep.subr.mxu0 0.0
  %1837 = vmatpush1.msra.mxu0 0.0
  %1838 = vmatprep.subr.mxu0 0.0
  %1839 = vmatpush1.msra.mxu0 0.0
  %1840 = vmatprep.subr.mxu0 0.0
  %1841 = vmatpush1.msra.mxu0 0.0
  %1842 = vmatprep.subr.mxu0 0.0
  %1843 = vmatpush1.msra.mxu0 0.0
  %1844 = vmatprep.subr.mxu0 0.0
  %1845 = vmatpush1.msra.mxu0 0.0
  %1846 = vmatprep.subr.mxu0 0.0
  %1847 = vmatpush1.msra.mxu0 0.0
  %1848 = vmatprep.subr.mxu0 0.0
  %1849 = vmatpush1.msra.mxu0 0.0
  %1850 = vmatprep.subr.mxu0 0.0
  %1851 = vmatpush1.msra.mxu0 0.0
  %1852 = vmatprep.subr.mxu0 0.0
  %1853 = vmatpush1.msra.mxu0 0.0
  %1854 = vmatprep.subr.mxu0 0.0
  %1855 = vmatpush1.msra.mxu0 0.0
  %1856 = vmatprep.subr.mxu0 0.0
  %1857 = vmatpush1.msra.mxu0 0.0
  %1858 = vmatprep.subr.mxu0 0.0
  %1859 = vmatpush1.msra.mxu0 0.0
  %1860 = vmatprep.subr.mxu0 0.0
  %1861 = vmatpush1.msra.mxu0 0.0
  %1862 = vmatprep.subr.mxu0 0.0
  %1863 = vmatpush1.msra.mxu0 0.0
  %1864 = vmatprep.subr.mxu0 0.0
  %1865 = vmatpush1.msra.mxu0 0.0
  %1866 = vmatprep.subr.mxu0 0.0
  %1867 = vmatpush1.msra.mxu0 0.0
  %1868 = vmatprep.subr.mxu0 0.0
  %1869 = vmatpush1.msra.mxu0 0.0
  %1870 = vmatprep.subr.mxu0 0.0
  %1871 = vmatpush1.msra.mxu0 0.0
  %1872 = vmatprep.subr.mxu0 0.0
  %1873 = vmatpush1.msra.mxu0 0.0
  %1874 = vmatprep.mubr.f32.mxu0 0.0
  %1875 = vmatmul.mubr.f32.gmra.mrb[0].mxu0 %v1808
  %v1876 = vpop.f32.mrb[0].mxu0
  %v1877 = vadd.f32 0.0, %v1876
  %v1878 = vpop.f32.mrb[0].mxu0
  %v1879 = vadd.f32 0.0, %v1878
  %1880 = vdwg.mxu0
  %v1881 = vadd.f32 %v1805, %v1877
  %v1882 = vadd.f32 %v1806, %v1879
  %v1883 = vmul.f32 %v1881, %v587
  %v1884 = vmul.f32 %v1882, %v588
  %v1885 = vrot.slane %v1883, 4
  %v1886 = vadd.f32 %v1883, %v1885
  %v1887 = vrot.slane %v1886, 2
  %v1888 = vadd.f32 %v1886, %v1887
  %v1889 = vrot.slane %v1888, 1
  %v1890 = vadd.f32 %v1888, %v1889
  %v1891 = vrot.slane %v1884, 4
  %v1892 = vadd.f32 %v1884, %v1891
  %v1893 = vrot.slane %v1892, 2
  %v1894 = vadd.f32 %v1892, %v1893
  %v1895 = vrot.slane %v1894, 1
  %v1896 = vadd.f32 %v1894, %v1895
  %vm1897 = vcmask 1040384
  %v1898 = vsel %vm1897, %v1272, %v1890
  %v1899 = vsel %vm1897, %v1278, %v1896
  %1901 = vrot.lane.b32.xlu0 %v1898, 96
  %v1902 = vpop.permute.xlu0 %1901
  %v1904 = vadd.f32 %v1898, %v1902
  %1905 = vrot.lane.b32.xlu0 %v1898, 64
  %v1906 = vpop.permute.xlu0 %1905
  %v1908 = vadd.f32 %v1904, %v1906
  %1909 = vrot.lane.b32.xlu0 %v1898, 32
  %v1910 = vpop.permute.xlu0 %1909
  %v1912 = vadd.f32 %v1908, %v1910
  %v1913 = vadd.f32 %v1912, %v1899
  %1915 = vrot.lane.b32.xlu0 %v1899, 96
  %v1916 = vpop.permute.xlu0 %1915
  %v1918 = vadd.f32 %v1913, %v1916
  %1919 = vrot.lane.b32.xlu0 %v1899, 64
  %v1920 = vpop.permute.xlu0 %1919
  %v1922 = vadd.f32 %v1918, %v1920
  %1923 = vrot.lane.b32.xlu0 %v1899, 32
  %v1924 = vpop.permute.xlu0 %1923
  %v1926 = vadd.f32 %v1922, %v1924
  %v1927 = vld [vmem:[%s6] sm:$0x1]
  %v1929 = vlaneseq
  %v1930 = vshrl.u32 %v1929, 7
  %v1931 = vsub.s32 0, %v1930
  %v1932 = vrot.slane %v1927, %v1931
  %v1934 = vadd.f32 %v1926, %v1932
  %v1935 = vmax.f32 %v1934, 0.0
  %v1936 = vld [vmem:[%s7] sm:$0x1]
  %v1938 = vlaneseq
  %v1939 = vshrl.u32 %v1938, 7
  %v1940 = vsub.s32 0, %v1939
  %v1941 = vrot.slane %v1936, %v1940
  %v1943 = vmul.f32 %v1935, %v1941
  %vm1944 = vcmask 254976
  %v1945 = vsel %vm1944, %v1943, 0.0
  %1946 = vadd.xlane.f32.xlu0 %v1945
  %v1947 = vpop.xlane.xlu0 %1946
  %v1948 = vld [vmem:[#allocation4] sm:$0x1]
  %v1950 = vlaneseq
  %v1951 = vshrl.u32 %v1950, 7
  %v1952 = vsub.s32 0, %v1951
  %v1953 = vrot.slane %v1948, %v1952
  %v1955 = vadd.f32 %v1947, %v1953
  %vm1956 = vcmask 1024
  %1957 = vst.msk [vmem:[%s10] sm:$0x3] %vm1956, %v1955
  // Predicated region
  $region42: #{multiplicative_basic_critic.1} parent=0 // pred_check
    _
  $region43: #{multiplicative_basic_critic.1} parent=0 // pred_check_branch
    %1959 = sbr.rel (0) target = $region45
  $region44: #{multiplicative_basic_critic.1} parent=0 // pred_region
    _
  $region45: #{multiplicative_basic_critic.1} parent=0 // pred_fallthru
    _
  // Predicated region
  $region46: #{multiplicative_basic_critic.1} parent=0 // pred_check
    _
  $region47: #{multiplicative_basic_critic.1} parent=0 // pred_check_branch
    %1961 = sbr.rel (0) target = $region49
  $region48: #{multiplicative_basic_critic.1} parent=0 // pred_region
    _
  $region49: #{multiplicative_basic_critic.1} parent=0 // pred_fallthru
    _
  %1962 = vsyncmov [#allocation3]
  %s1963 = vpop.sfrf %1962
  %p1964 = scmp.eq.s32.totalorder %s1963, 0
  %p1965 = pneg %p1964
  %1967 = shalt.err (%p1965)

</llo_original>
